<compile_context>
chip_gen: v7x
topology: tpu7x:2x2x1
jax: 0.10.0
libtpu: 0.0.40
codegen_flags: <defaults>
</compile_context>

<pallas_src>
import functools

import jax
import jax.numpy as jnp
from jax.experimental import pallas as pl
from jax.experimental.pallas import tpu as pltpu


def _round_up(v, m):
    return (v + m - 1) // m * m


# ---------------- pass 1: T = relu((adj @ x) @ W1) @ W2 ---------------------
def _gcn_layer1_kernel(adj_ref, x_ref, w1_ref, w2_ref, t_ref, acc_ref, *, tk):
    k = pl.program_id(1)

    @pl.when(k == 0)
    def _():
        acc_ref[...] = jnp.zeros_like(acc_ref)

    ks = pl.multiple_of(k * tk, tk)
    acc_ref[...] += jnp.dot(adj_ref[...], x_ref[pl.ds(ks, tk), :],
                            preferred_element_type=jnp.float32)

    @pl.when(k == pl.num_programs(1) - 1)
    def _():
        # (adj @ x) @ W1 == adj @ (x @ W1); relu; fold W2 in so pass 2 only
        # needs the narrow T operand.  Thin matmuls run once per row tile.
        h = jnp.maximum(
            jnp.dot(acc_ref[...], w1_ref[...],
                    preferred_element_type=jnp.float32), 0.0)
        # TODO(synk): F.dropout with training=True would need
        # pltpu.prng_random_bits; eval-mode dropout is the identity.
        t_ref[...] = jnp.dot(h, w2_ref[...],
                             preferred_element_type=jnp.float32
                             ).astype(t_ref.dtype)


# ---------------- pass 2: out = adj @ T -------------------------------------
def _gcn_layer2_kernel(adj_ref, t_ref, out_ref, acc_ref, *, tk):
    k = pl.program_id(1)

    @pl.when(k == 0)
    def _():
        acc_ref[...] = jnp.zeros_like(acc_ref)

    ks = pl.multiple_of(k * tk, tk)
    acc_ref[...] += jnp.dot(adj_ref[...], t_ref[pl.ds(ks, tk), :],
                            preferred_element_type=jnp.float32)

    @pl.when(k == pl.num_programs(1) - 1)
    def _():
        out_ref[...] = acc_ref[...].astype(out_ref.dtype)


def gcn_forward(x, adj, w1, w2, dropout_p=0.5):
    """Forward pass of the GCN module (inference / eval mode)."""
    del dropout_p  # eval-mode dropout == identity
    n, nfeat = x.shape
    nhid = w1.shape[1]
    nclass = w2.shape[1]

    # Lane-pad feature dims to 128 (full MXU columns, unmasked stores).
    F = _round_up(nfeat, 128)
    H = _round_up(nhid, 128)
    C = _round_up(nclass, 128)

    # Pad node count so adj tiles satisfy the (8,128) block constraint; pick
    # the largest of {512, 256, 128} that divides it (bigger adj tiles ->
    # better HBM pipelining for the mem-bound adj stream).
    np_ = _round_up(n, 128)
    tile = 128
    for t in (512, 256, 128):
        if np_ % t == 0:
            tile = t
            break
    tm = tk = tile
    r = np_ // tm
    kk = np_ // tk

    # bf16 for the large N^2-matmul operands (adj is 0/1 -> exact in bf16).
    adj_p = jnp.zeros((np_, np_), jnp.bfloat16).at[:n, :n].set(
        adj.astype(jnp.bfloat16))
    x_p = jnp.zeros((np_, F), jnp.bfloat16).at[:n, :nfeat].set(
        x.astype(jnp.bfloat16))
    w1_p = jnp.zeros((F, H), jnp.float32).at[:nfeat, :nhid].set(
        w1.astype(jnp.float32))
    w2_p = jnp.zeros((H, C), jnp.float32).at[:nhid, :nclass].set(
        w2.astype(jnp.float32))

    params = pltpu.CompilerParams(
        # Row tiles are independent -> megacore-shardable on v7x; reduction
        # axis stays sequential (accumulator carried across k).
        dimension_semantics=("parallel", "arbitrary"))

    # ---- pass 1 ----
    cost1 = pl.CostEstimate(
        flops=2 * np_ * np_ * F + 2 * np_ * F * H + 2 * np_ * H * C,
        transcendentals=0,
        bytes_accessed=(adj_p.size * 2 + x_p.size * 2 + w1_p.size * 4
                        + w2_p.size * 4 + np_ * C * 2))
    t_p = pl.pallas_call(
        functools.partial(_gcn_layer1_kernel, tk=tk),
        out_shape=jax.ShapeDtypeStruct((np_, C), jnp.bfloat16),
        grid_spec=pltpu.PrefetchScalarGridSpec(
            num_scalar_prefetch=0,
            grid=(r, kk),
            in_specs=[
                # adj: streamed (tm, tk) tiles
                pl.BlockSpec((tm, tk), lambda i, k: (i, k)),
                # x, W1, W2: small, fully VMEM-resident (fetched once)
                pl.BlockSpec((np_, F), lambda i, k: (0, 0)),
                pl.BlockSpec((F, H), lambda i, k: (0, 0)),
                pl.BlockSpec((H, C), lambda i, k: (0, 0)),
            ],
            out_specs=pl.BlockSpec((tm, C), lambda i, k: (i, 0)),
            scratch_shapes=[pltpu.VMEM((tm, F), jnp.float32)],
        ),
        compiler_params=params,
        cost_estimate=cost1,
    )(adj_p, x_p, w1_p, w2_p)

    # ---- pass 2 ----
    cost2 = pl.CostEstimate(
        flops=2 * np_ * np_ * C,
        transcendentals=0,
        bytes_accessed=adj_p.size * 2 + np_ * C * 2 + np_ * C * 4)
    out_p = pl.pallas_call(
        functools.partial(_gcn_layer2_kernel, tk=tk),
        out_shape=jax.ShapeDtypeStruct((np_, C), jnp.float32),
        grid_spec=pltpu.PrefetchScalarGridSpec(
            num_scalar_prefetch=0,
            grid=(r, kk),
            in_specs=[
                pl.BlockSpec((tm, tk), lambda i, k: (i, k)),
                # T: small, fully VMEM-resident (fetched once)
                pl.BlockSpec((np_, C), lambda i, k: (0, 0)),
            ],
            out_specs=pl.BlockSpec((tm, C), lambda i, k: (i, 0)),
            scratch_shapes=[pltpu.VMEM((tm, C), jnp.float32)],
        ),
        compiler_params=params,
        cost_estimate=cost2,
    )(adj_p, t_p)

    return out_p[:n, :nclass]


def _glorot(key, shape):
    fan_in, fan_out = shape
    limit = jnp.sqrt(6.0 / (fan_in + fan_out))
    return jax.random.uniform(key, shape, jnp.float32, -limit, limit)


if __name__ == "__main__":
    key = jax.random.PRNGKey(0)
    k_x, k_adj, k_w1, k_w2 = jax.random.split(key, 4)

    # Small, deterministic problem. N=300 is intentionally not a multiple of
    # the tile so the padding + multi-tile reduction paths are exercised.
    N, NFEAT, NHID, NCLASS = 300, 16, 32, 8

    x = jax.random.normal(k_x, (N, NFEAT), jnp.float32)

    # Deterministic sparse-ish symmetric 0/1 adjacency (dense layout, no
    # self-loops, unnormalized: normalize=False, add_self_loops=False).
    a = (jax.random.uniform(k_adj, (N, N)) < 0.2).astype(jnp.float32)
    adj = jnp.maximum(a, a.T) * (1.0 - jnp.eye(N, dtype=jnp.float32))

    w1 = _glorot(k_w1, (NFEAT, NHID))
    w2 = _glorot(k_w2, (NHID, NCLASS))

    fwd = jax.jit(gcn_forward)
    out = fwd(x, adj, w1, w2)
    out = jax.block_until_ready(out)

    # Reference in plain f32 JAX (kernel uses bf16 operands on the N^2 matmuls
    # with f32 accumulation, so the check is a loose relative one).
    ref = adj @ jnp.maximum(adj @ (x @ w1), 0.0) @ w2
    assert out.shape == (N, NCLASS)
    err = float(jnp.max(jnp.abs(out - ref)))
    scale = float(jnp.max(jnp.abs(ref))) + 1e-6
    assert err <= 2.5e-2 * scale, (err, scale)

    print("KERNEL_OK")
</pallas_src>

<mosaic_0001>
module attributes {stable_mosaic.version = 11 : i64} {
  func.func @_gcn_layer1_kernel(%arg0: i32, %arg1: i32, %arg2: memref<128x128xbf16, #tpu.memory_space<vmem>>, %arg3: memref<384x128xbf16, #tpu.memory_space<vmem>>, %arg4: memref<128x128xf32, #tpu.memory_space<vmem>>, %arg5: memref<128x128xf32, #tpu.memory_space<vmem>>, %arg6: memref<128x128xbf16, #tpu.memory_space<vmem>>, %arg7: memref<128x128xf32, #tpu.memory_space<vmem>>) attributes {dimension_semantics = [#tpu.dimension_semantics<parallel>, #tpu.dimension_semantics<arbitrary>], iteration_bounds = array<i64: 3, 3>, scalar_prefetch = 0 : i64, scratch_operands = 1 : i64, tpu.core_type = #tpu.core_type<tc>, window_params = [{transform_indices = @transform_0, window_bounds = array<i64: 128, 128>}, {pipeline_mode = #tpu.pipeline_mode<synchronous>, transform_indices = @transform_1, window_bounds = array<i64: 384, 128>}, {pipeline_mode = #tpu.pipeline_mode<synchronous>, transform_indices = @transform_2, window_bounds = array<i64: 128, 128>}, {pipeline_mode = #tpu.pipeline_mode<synchronous>, transform_indices = @transform_3, window_bounds = array<i64: 128, 128>}, {transform_indices = @transform_4, window_bounds = array<i64: 128, 128>}]} {
    %c0_i32 = arith.constant 0 : i32
    %0 = arith.cmpi eq, %arg1, %c0_i32 : i32
    %1 = arith.extui %0 : i1 to i32
    %c0_i32_0 = arith.constant 0 : i32
    %2 = arith.cmpi ne, %1, %c0_i32_0 : i32
    scf.if %2 {
      %cst_8 = arith.constant 0.000000e+00 : f32
      %15 = vector.broadcast %cst_8 : f32 to vector<128x128xf32>
      %c0_9 = arith.constant 0 : index
      %c0_10 = arith.constant 0 : index
      %16 = vector.load %arg7[%c0_9, %c0_10] : memref<128x128xf32, #tpu.memory_space<vmem>>, vector<128x128xf32>
      tpu.vector_store %arg7[%c0_9, %c0_10], %15 {strides = array<i32>} : memref<128x128xf32, #tpu.memory_space<vmem>>, vector<128x128xf32>,
    } else {
    }
    %c128_i32 = arith.constant 128 : i32
    %3 = arith.muli %arg1, %c128_i32 : i32
    %4 = tpu.assume_multiple %3, 128 : i32
    %c0 = arith.constant 0 : index
    %c0_1 = arith.constant 0 : index
    %5 = vector.load %arg7[%c0, %c0_1] : memref<128x128xf32, #tpu.memory_space<vmem>>, vector<128x128xf32>
    %c0_2 = arith.constant 0 : index
    %c0_3 = arith.constant 0 : index
    %6 = vector.load %arg2[%c0_2, %c0_3] : memref<128x128xbf16, #tpu.memory_space<vmem>>, vector<128x128xbf16>
    %7 = arith.index_cast %4 : i32 to index
    %c0_4 = arith.constant 0 : index
    %8 = vector.load %arg3[%7, %c0_4] : memref<384x128xbf16, #tpu.memory_space<vmem>>, vector<128x128xbf16>
    %cst = arith.constant dense<0.000000e+00> : vector<128x128xf32>
    %9 = tpu.matmul %6, %8, %cst {dimension_numbers = #tpu.dot_dimension_numbers<[1], [0], [0], [1], [0, 0, 1, 1], [], []>} : vector<128x128xbf16>, vector<128x128xbf16>, vector<128x128xf32> -> vector<128x128xf32>
    %10 = arith.addf %5, %9 : vector<128x128xf32>
    %c0_5 = arith.constant 0 : index
    %c0_6 = arith.constant 0 : index
    %11 = vector.load %arg7[%c0_5, %c0_6] : memref<128x128xf32, #tpu.memory_space<vmem>>, vector<128x128xf32>
    tpu.vector_store %arg7[%c0_5, %c0_6], %10 {strides = array<i32>} : memref<128x128xf32, #tpu.memory_space<vmem>>, vector<128x128xf32>,
    %c2_i32 = arith.constant 2 : i32
    %12 = arith.cmpi eq, %arg1, %c2_i32 : i32
    %13 = arith.extui %12 : i1 to i32
    %c0_i32_7 = arith.constant 0 : i32
    %14 = arith.cmpi ne, %13, %c0_i32_7 : i32
    scf.if %14 {
      %c0_8 = arith.constant 0 : index
      %c0_9 = arith.constant 0 : index
      %15 = vector.load %arg7[%c0_8, %c0_9] : memref<128x128xf32, #tpu.memory_space<vmem>>, vector<128x128xf32>
      %c0_10 = arith.constant 0 : index
      %c0_11 = arith.constant 0 : index
      %16 = vector.load %arg4[%c0_10, %c0_11] : memref<128x128xf32, #tpu.memory_space<vmem>>, vector<128x128xf32>
      %cst_12 = arith.constant dense<0.000000e+00> : vector<128x128xf32>
      %17 = tpu.matmul %15, %16, %cst_12 {dimension_numbers = #tpu.dot_dimension_numbers<[1], [0], [0], [1], [0, 0, 1, 1], [], []>} : vector<128x128xf32>, vector<128x128xf32>, vector<128x128xf32> -> vector<128x128xf32>
      %cst_13 = arith.constant 0.000000e+00 : f32
      %18 = vector.broadcast %cst_13 : f32 to vector<128x128xf32>
      %19 = arith.maximumf %17, %18 : vector<128x128xf32>
      %c0_14 = arith.constant 0 : index
      %c0_15 = arith.constant 0 : index
      %20 = vector.load %arg5[%c0_14, %c0_15] : memref<128x128xf32, #tpu.memory_space<vmem>>, vector<128x128xf32>
      %cst_16 = arith.constant dense<0.000000e+00> : vector<128x128xf32>
      %21 = tpu.matmul %19, %20, %cst_16 {dimension_numbers = #tpu.dot_dimension_numbers<[1], [0], [0], [1], [0, 0, 1, 1], [], []>} : vector<128x128xf32>, vector<128x128xf32>, vector<128x128xf32> -> vector<128x128xf32>
      %22 = arith.truncf %21 : vector<128x128xf32> to vector<128x128xbf16>
      %c0_17 = arith.constant 0 : index
      %c0_18 = arith.constant 0 : index
      %23 = vector.load %arg6[%c0_17, %c0_18] : memref<128x128xbf16, #tpu.memory_space<vmem>>, vector<128x128xbf16>
      tpu.vector_store %arg6[%c0_17, %c0_18], %22 {strides = array<i32>} : memref<128x128xbf16, #tpu.memory_space<vmem>>, vector<128x128xbf16>,
    } else {
    }
    return
  }
  func.func @transform_0(%arg0: i32, %arg1: i32) -> (i32, i32) {
    %c0_i32 = arith.constant 0 : i32
    return %arg0, %arg1 : i32, i32
  }
  func.func @transform_1(%arg0: i32, %arg1: i32) -> (i32, i32) {
    %c0_i32 = arith.constant 0 : i32
    %c0_i32_0 = arith.constant 0 : i32
    %c0_i32_1 = arith.constant 0 : i32
    return %c0_i32, %c0_i32_0 : i32, i32
  }
  func.func @transform_2(%arg0: i32, %arg1: i32) -> (i32, i32) {
    %c0_i32 = arith.constant 0 : i32
    %c0_i32_0 = arith.constant 0 : i32
    %c0_i32_1 = arith.constant 0 : i32
    return %c0_i32, %c0_i32_0 : i32, i32
  }
  func.func @transform_3(%arg0: i32, %arg1: i32) -> (i32, i32) {
    %c0_i32 = arith.constant 0 : i32
    %c0_i32_0 = arith.constant 0 : i32
    %c0_i32_1 = arith.constant 0 : i32
    return %c0_i32, %c0_i32_0 : i32, i32
  }
  func.func @transform_4(%arg0: i32, %arg1: i32) -> (i32, i32) {
    %c0_i32 = arith.constant 0 : i32
    %c0_i32_0 = arith.constant 0 : i32
    return %arg0, %c0_i32 : i32, i32
  }
}

module attributes {stable_mosaic.version = 11 : i64} {
  func.func @_gcn_layer2_kernel(%arg0: i32, %arg1: i32, %arg2: memref<128x128xbf16, #tpu.memory_space<vmem>>, %arg3: memref<384x128xbf16, #tpu.memory_space<vmem>>, %arg4: memref<128x128xf32, #tpu.memory_space<vmem>>, %arg5: memref<128x128xf32, #tpu.memory_space<vmem>>) attributes {dimension_semantics = [#tpu.dimension_semantics<parallel>, #tpu.dimension_semantics<arbitrary>], iteration_bounds = array<i64: 3, 3>, scalar_prefetch = 0 : i64, scratch_operands = 1 : i64, tpu.core_type = #tpu.core_type<tc>, window_params = [{transform_indices = @transform_0, window_bounds = array<i64: 128, 128>}, {pipeline_mode = #tpu.pipeline_mode<synchronous>, transform_indices = @transform_1, window_bounds = array<i64: 384, 128>}, {transform_indices = @transform_2, window_bounds = array<i64: 128, 128>}]} {
    %c0_i32 = arith.constant 0 : i32
    %0 = arith.cmpi eq, %arg1, %c0_i32 : i32
    %1 = arith.extui %0 : i1 to i32
    %c0_i32_0 = arith.constant 0 : i32
    %2 = arith.cmpi ne, %1, %c0_i32_0 : i32
    scf.if %2 {
      %cst_8 = arith.constant 0.000000e+00 : f32
      %15 = vector.broadcast %cst_8 : f32 to vector<128x128xf32>
      %c0_9 = arith.constant 0 : index
      %c0_10 = arith.constant 0 : index
      %16 = vector.load %arg5[%c0_9, %c0_10] : memref<128x128xf32, #tpu.memory_space<vmem>>, vector<128x128xf32>
      tpu.vector_store %arg5[%c0_9, %c0_10], %15 {strides = array<i32>} : memref<128x128xf32, #tpu.memory_space<vmem>>, vector<128x128xf32>,
    } else {
    }
    %c128_i32 = arith.constant 128 : i32
    %3 = arith.muli %arg1, %c128_i32 : i32
    %4 = tpu.assume_multiple %3, 128 : i32
    %c0 = arith.constant 0 : index
    %c0_1 = arith.constant 0 : index
    %5 = vector.load %arg5[%c0, %c0_1] : memref<128x128xf32, #tpu.memory_space<vmem>>, vector<128x128xf32>
    %c0_2 = arith.constant 0 : index
    %c0_3 = arith.constant 0 : index
    %6 = vector.load %arg2[%c0_2, %c0_3] : memref<128x128xbf16, #tpu.memory_space<vmem>>, vector<128x128xbf16>
    %7 = arith.index_cast %4 : i32 to index
    %c0_4 = arith.constant 0 : index
    %8 = vector.load %arg3[%7, %c0_4] : memref<384x128xbf16, #tpu.memory_space<vmem>>, vector<128x128xbf16>
    %cst = arith.constant dense<0.000000e+00> : vector<128x128xf32>
    %9 = tpu.matmul %6, %8, %cst {dimension_numbers = #tpu.dot_dimension_numbers<[1], [0], [0], [1], [0, 0, 1, 1], [], []>} : vector<128x128xbf16>, vector<128x128xbf16>, vector<128x128xf32> -> vector<128x128xf32>
    %10 = arith.addf %5, %9 : vector<128x128xf32>
    %c0_5 = arith.constant 0 : index
    %c0_6 = arith.constant 0 : index
    %11 = vector.load %arg5[%c0_5, %c0_6] : memref<128x128xf32, #tpu.memory_space<vmem>>, vector<128x128xf32>
    tpu.vector_store %arg5[%c0_5, %c0_6], %10 {strides = array<i32>} : memref<128x128xf32, #tpu.memory_space<vmem>>, vector<128x128xf32>,
    %c2_i32 = arith.constant 2 : i32
    %12 = arith.cmpi eq, %arg1, %c2_i32 : i32
    %13 = arith.extui %12 : i1 to i32
    %c0_i32_7 = arith.constant 0 : i32
    %14 = arith.cmpi ne, %13, %c0_i32_7 : i32
    scf.if %14 {
      %c0_8 = arith.constant 0 : index
      %c0_9 = arith.constant 0 : index
      %15 = vector.load %arg5[%c0_8, %c0_9] : memref<128x128xf32, #tpu.memory_space<vmem>>, vector<128x128xf32>
      %c0_10 = arith.constant 0 : index
      %c0_11 = arith.constant 0 : index
      %16 = vector.load %arg4[%c0_10, %c0_11] : memref<128x128xf32, #tpu.memory_space<vmem>>, vector<128x128xf32>
      tpu.vector_store %arg4[%c0_10, %c0_11], %15 {strides = array<i32>} : memref<128x128xf32, #tpu.memory_space<vmem>>, vector<128x128xf32>,
    } else {
    }
    return
  }
  func.func @transform_0(%arg0: i32, %arg1: i32) -> (i32, i32) {
    %c0_i32 = arith.constant 0 : i32
    return %arg0, %arg1 : i32, i32
  }
  func.func @transform_1(%arg0: i32, %arg1: i32) -> (i32, i32) {
    %c0_i32 = arith.constant 0 : i32
    %c0_i32_0 = arith.constant 0 : i32
    %c0_i32_1 = arith.constant 0 : i32
    return %c0_i32, %c0_i32_0 : i32, i32
  }
  func.func @transform_2(%arg0: i32, %arg1: i32) -> (i32, i32) {
    %c0_i32 = arith.constant 0 : i32
    %c0_i32_0 = arith.constant 0 : i32
    return %arg0, %c0_i32 : i32, i32
  }
}

</mosaic_0001>

<llo_original>
// kernel: gcn_forward.3
$region0: #{gcn_forward.3}
  #allocation0 [shape = 'u32[]', space=smem, size = 0x4, offset = 0x4, fixed_abs, tag = 'smem constant byte address 0x4 - core index']
  #allocation1 [shape = 'u32[144,128]{1,0:T(1,128)}', space=vmem, size = 0x12000, scoped, tag = 'internal scratch']
  #allocation2 [shape = 'f32[128,128]{1,0:T(8,128)}', space=vmem, size = 0x10000, scoped, tag = 'scratch operand']
  %s0 = inlined_call_operand.vmem [shape: bf16[384,384], index: 0, kind: input, shape index: {}]
  %s1 = inlined_call_operand.vmem [shape: bf16[384,128], index: 1, kind: input, shape index: {}]
  %s2 = inlined_call_operand.vmem [shape: f32[384,128], index: 2, kind: output, shape index: {}]
  %s3 = sld [smem:[#allocation0]]
  $region90: #{gcn_forward.3} parent=0
    _
  %s5 = ssub.s32 1, %s3
  %s6 = scalar_select 0, %s5, %s3
  $region1: #{gcn_forward.3} parent=0
    #allocation3 [shape = 'u8[65536]{0}', space=vmem, size = 0x10000, scoped, tag = 'input window, operand 0']
    loop: start=0, step=1, limit=11
    $region2: #{gcn_forward.3} parent=1 // loop_pre_header
      _
    $region3: #{gcn_forward.3} parent=1 // loop_header
      %s8 = sphi 0, %s12
      %p9 = scmp.ge.s32.totalorder %s8, 11
      %s15 = sphi 0, %s27
      %s16 = sphi 0, %s23
      %s17 = sphi 0, %s15
      %s18 = sphi 0, %s16
      %s19 = sphi 0, %s17
      %s20 = sphi 0, %s18
      %s32 = sphi 0, %s34
      %s35 = sphi 0, %s32
      %s36 = sphi 0, %s35
      %s52 = sphi 0, %s36
      %s56 = sphi 0, %s56
      %s58 = sphi 0, %s56
      %s59 = sphi 0, %s58
      %s73 = sphi 0, %s59
      %s79 = sphi 0, %s81
      %s82 = sphi 0, %s79
      %s83 = sphi 0, %s82
      %s99 = sphi 0, %s83
    $region4: #{gcn_forward.3} parent=1 // loop_header_branch
      %11 = sbr.rel (%p9) target = $region8
    $region5: #{gcn_forward.3} parent=1 // loop_body
      %s13 = ssub.s32 %s8, 1
      %s14 = ssub.s32 %s8, 2
      %s21 = sadd.s32 1, %s16
      %p22 = scmp.ge.s32.totalorder %s21, 3
      %s23 = scalar_select %p22, 0, %s21
      %s24 = sadd.s32 1, %s15
      %s25 = scalar_select %p22, %s24, %s15
      %p26 = scmp.ge.s32.totalorder %s25, 3
      %s27 = scalar_select %p26, 0, %s25
      %s28 = ssub.s32 %s15, %s27
      %s29 = ssub.s32 %s16, %s23
      %s30 = sor.u32 %s28, %s29
      %p31 = scmp.eq.s32.totalorder %s30, 0
      %s33 = sadd.s32 %s32, 1
      %s34 = scalar_select %p31, %s32, %s33
      %p37 = pneg %p31
      %p38 = scmp.eq.s32.totalorder %s8, 8
      %p39 = por %p37, %p38
      %p40 = scmp.ne.s32.totalorder %s32, %s35
      %p41 = scmp.eq.s32.totalorder %s8, 0
      %p42 = por %p40, %p41
      %p43 = scmp.ne.s32.totalorder %s32, %s35
      %p44 = scmp.eq.s32.totalorder %s13, 8
      %p45 = por %p43, %p44
      %p46 = scmp.ne.s32.totalorder %s35, %s36
      %p47 = scmp.eq.s32.totalorder %s13, 0
      %p48 = por %p46, %p47
      %p49 = scmp.ne.s32.totalorder %s35, %s36
      %p50 = scmp.eq.s32.totalorder %s14, 8
      %p51 = por %p49, %p50
      %p53 = scmp.ne.s32.totalorder %s36, %s52
      %p54 = scmp.eq.s32.totalorder %s14, 0
      %p55 = por %p53, %p54
      %s57 = sadd.s32 %s56, 1
      %p60 = scmp.eq.s32.totalorder %s8, 8
      %p61 = scmp.ne.s32.totalorder %s56, %s58
      %p62 = scmp.eq.s32.totalorder %s8, 0
      %p63 = por %p61, %p62
      %p64 = scmp.ne.s32.totalorder %s56, %s58
      %p65 = scmp.eq.s32.totalorder %s13, 8
      %p66 = por %p64, %p65
      %p67 = scmp.ne.s32.totalorder %s58, %s59
      %p68 = scmp.eq.s32.totalorder %s13, 0
      %p69 = por %p67, %p68
      %p70 = scmp.ne.s32.totalorder %s58, %s59
      %p71 = scmp.eq.s32.totalorder %s14, 8
      %p72 = por %p70, %p71
      %p74 = scmp.ne.s32.totalorder %s59, %s73
      %p75 = scmp.eq.s32.totalorder %s14, 0
      %p76 = por %p74, %p75
      %s77 = ssub.s32 %s15, %s27
      %p78 = scmp.eq.s32.totalorder %s77, 0
      %s80 = sadd.s32 %s79, 1
      %s81 = scalar_select %p78, %s79, %s80
      %p84 = pneg %p78
      %p85 = scmp.eq.s32.totalorder %s8, 8
      %p86 = por %p84, %p85
      %p87 = scmp.ne.s32.totalorder %s79, %s82
      %p88 = scmp.eq.s32.totalorder %s8, 0
      %p89 = por %p87, %p88
      %p90 = scmp.ne.s32.totalorder %s79, %s82
      %p91 = scmp.eq.s32.totalorder %s13, 8
      %p92 = por %p90, %p91
      %p93 = scmp.ne.s32.totalorder %s82, %s83
      %p94 = scmp.eq.s32.totalorder %s13, 0
      %p95 = por %p93, %p94
      %p96 = scmp.ne.s32.totalorder %s82, %s83
      %p97 = scmp.eq.s32.totalorder %s14, 8
      %p98 = por %p96, %p97
      %p100 = scmp.ne.s32.totalorder %s83, %s99
      %p101 = scmp.eq.s32.totalorder %s14, 0
      %p102 = por %p100, %p101
      %p103 = scmp.le.s32.totalorder 1, %s8
      %p104 = scmp.lt.s32.totalorder %s8, 10
      %p105 = pnand %p103, %p104
      %p106 = pneg %p105
      // Predicated region
      $region9: #{gcn_forward.3} parent=5 // pred_check
        _
      $region10: #{gcn_forward.3} parent=5 // pred_check_branch
        %108 = sbr.rel (%p105) target = $region12
      $region11: #{gcn_forward.3} parent=5 // pred_region
        %s109 = ssub.s32 %s8, 1
        // Predicated region
        $region13: #{gcn_forward.3} parent=11 // pred_check
          %p110 = pneg %p69
        $region14: #{gcn_forward.3} parent=11 // pred_check_branch
          %112 = sbr.rel (%p110) target = $region16
        $region15: #{gcn_forward.3} parent=11 // pred_region
          _
        $region16: #{gcn_forward.3} parent=11 // pred_fallthru
          _
      $region12: #{gcn_forward.3} parent=5 // pred_fallthru
        _
      %p113 = scmp.lt.s32.totalorder %s8, 9
      // Predicated region
      $region17: #{gcn_forward.3} parent=5 // pred_check
        %p114 = pneg %p113
      $region18: #{gcn_forward.3} parent=5 // pred_check_branch
        %116 = sbr.rel (%p114) target = $region20
      $region19: #{gcn_forward.3} parent=5 // pred_region
        // Predicated region
        $region21: #{gcn_forward.3} parent=19 // pred_check
          %p117 = pneg %p42
        $region22: #{gcn_forward.3} parent=19 // pred_check_branch
          %119 = sbr.rel (%p117) target = $region24
        $region23: #{gcn_forward.3} parent=19 // pred_region
          %s120 = sand.u32 %s32, 1
          %s121 = sand.u32 %s32, 1
          %s122 = smul.addr %s121, 64
          %s123 = scalar_lea.vmem [#allocation3], %s122
          %s124 = smul.u32 16, %s15
          %s125 = smul.addr %s124, 3
          %s126 = sadd.s32 %s16, %s125
          %s127 = smul.addr %s126, 4
          %s128 = scalar_lea.vmem %s0, %s127
          // Predicated region
          $region25: #{gcn_forward.3} parent=23 // pred_check
            _
          $region26: #{gcn_forward.3} parent=23 // pred_check_branch
            %130 = sbr.rel (0) target = $region28
          $region27: #{gcn_forward.3} parent=23 // pred_region
            // Predicated region
            $region29: #{gcn_forward.3} parent=27 // pred_check
              _
            $region30: #{gcn_forward.3} parent=27 // pred_check_branch
              %132 = sbr.rel target = $region32
            $region31: #{gcn_forward.3} parent=27 // pred_region
              // Predicated region
              $region44: #{gcn_forward.3} parent=31 // pred_check
                _
              $region45: #{gcn_forward.3} parent=31 // pred_check_branch
                %177 = sbr.rel (0) target = $region47
              $region46: #{gcn_forward.3} parent=31 // pred_region
                loop: start=0, step=1, limit=1
                $region48: #{gcn_forward.3} parent=46 // loop_pre_header
                  _
                $region49: #{gcn_forward.3} parent=46 // loop_header
                  %s179 = sphi 0, %s183
                  %p180 = scmp.ge.s32.totalorder %s179, 1
                  %s184 = sphi %s128, %s128
                  %s185 = sphi %s123, %s123
                $region50: #{gcn_forward.3} parent=46 // loop_header_branch
                  %182 = sbr.rel (%p180) target = $region54
                $region51: #{gcn_forward.3} parent=46 // loop_body
                  _
                $region52: #{gcn_forward.3} parent=46 // loop_footer
                  %s183 = sadd.s32 1, %s179
                $region53: #{gcn_forward.3} parent=46 // loop_footer_branch
                  %178 = sbr.rel target = $region49
                $region54: #{gcn_forward.3} parent=46 // loop_exit
                  _
                loop: start=0, step=1, limit=1
                $region55: #{gcn_forward.3} parent=46 // loop_pre_header
                  _
                $region56: #{gcn_forward.3} parent=46 // loop_header
                  %s188 = sphi 0, %s192
                  %p189 = scmp.ge.s32.totalorder %s188, 1
                  %s193 = sphi %s128, %s128
                  %s194 = sphi %s123, %s123
                $region57: #{gcn_forward.3} parent=46 // loop_header_branch
                  %191 = sbr.rel (%p189) target = $region61
                $region58: #{gcn_forward.3} parent=46 // loop_body
                  %v195 = vld [vmem:[%s193] sm:$0xf]
                  %196 = vst [vmem:[%s194] sm:$0xf] %v195
                  %v197 = vld [vmem:[%s193 + $0xc] sm:$0xf]
                  %198 = vst [vmem:[%s194 + $0x4] sm:$0xf] %v197
                  %v199 = vld [vmem:[%s193 + $0x18] sm:$0xf]
                  %200 = vst [vmem:[%s194 + $0x8] sm:$0xf] %v199
                  %v201 = vld [vmem:[%s193 + $0x24] sm:$0xf]
                  %202 = vst [vmem:[%s194 + $0xc] sm:$0xf] %v201
                  %v203 = vld [vmem:[%s193 + $0x30] sm:$0xf]
                  %204 = vst [vmem:[%s194 + $0x10] sm:$0xf] %v203
                  %v205 = vld [vmem:[%s193 + $0x3c] sm:$0xf]
                  %206 = vst [vmem:[%s194 + $0x14] sm:$0xf] %v205
                  %v207 = vld [vmem:[%s193 + $0x48] sm:$0xf]
                  %208 = vst [vmem:[%s194 + $0x18] sm:$0xf] %v207
                  %v209 = vld [vmem:[%s193 + $0x54] sm:$0xf]
                  %210 = vst [vmem:[%s194 + $0x1c] sm:$0xf] %v209
                  %v211 = vld [vmem:[%s193 + $0x60] sm:$0xf]
                  %212 = vst [vmem:[%s194 + $0x20] sm:$0xf] %v211
                  %v213 = vld [vmem:[%s193 + $0x6c] sm:$0xf]
                  %214 = vst [vmem:[%s194 + $0x24] sm:$0xf] %v213
                  %v215 = vld [vmem:[%s193 + $0x78] sm:$0xf]
                  %216 = vst [vmem:[%s194 + $0x28] sm:$0xf] %v215
                  %v217 = vld [vmem:[%s193 + $0x84] sm:$0xf]
                  %218 = vst [vmem:[%s194 + $0x2c] sm:$0xf] %v217
                  %v219 = vld [vmem:[%s193 + $0x90] sm:$0xf]
                  %220 = vst [vmem:[%s194 + $0x30] sm:$0xf] %v219
                  %v221 = vld [vmem:[%s193 + $0x9c] sm:$0xf]
                  %222 = vst [vmem:[%s194 + $0x34] sm:$0xf] %v221
                  %v223 = vld [vmem:[%s193 + $0xa8] sm:$0xf]
                  %224 = vst [vmem:[%s194 + $0x38] sm:$0xf] %v223
                  %v225 = vld [vmem:[%s193 + $0xb4] sm:$0xf]
                  %226 = vst [vmem:[%s194 + $0x3c] sm:$0xf] %v225
                $region59: #{gcn_forward.3} parent=46 // loop_footer
                  %s192 = sadd.s32 1, %s188
                $region60: #{gcn_forward.3} parent=46 // loop_footer_branch
                  %187 = sbr.rel target = $region56
                $region61: #{gcn_forward.3} parent=46 // loop_exit
                  _
              $region47: #{gcn_forward.3} parent=31 // pred_fallthru
                _
            $region32: #{gcn_forward.3} parent=27 // pred_fallthru
              _
            // Predicated region
            $region33: #{gcn_forward.3} parent=27 // pred_check
              _
            $region34: #{gcn_forward.3} parent=27 // pred_check_branch
              %134 = sbr.rel (0) target = $region36
            $region35: #{gcn_forward.3} parent=27 // pred_region
              loop: start=0, step=1, limit=1
              $region37: #{gcn_forward.3} parent=35 // loop_pre_header
                _
              $region38: #{gcn_forward.3} parent=35 // loop_header
                %s137 = sphi 0, %s141
                %p138 = scmp.ge.s32.totalorder %s137, 1
                %s142 = sphi %s128, %s128
                %s143 = sphi %s123, %s123
              $region39: #{gcn_forward.3} parent=35 // loop_header_branch
                %140 = sbr.rel (%p138) target = $region43
              $region40: #{gcn_forward.3} parent=35 // loop_body
                %v144 = vld [vmem:[%s142] sm:$0xf]
                %145 = vst [vmem:[%s143] sm:$0xf] %v144
                %v146 = vld [vmem:[%s142 + $0xc] sm:$0xf]
                %147 = vst [vmem:[%s143 + $0x4] sm:$0xf] %v146
                %v148 = vld [vmem:[%s142 + $0x18] sm:$0xf]
                %149 = vst [vmem:[%s143 + $0x8] sm:$0xf] %v148
                %v150 = vld [vmem:[%s142 + $0x24] sm:$0xf]
                %151 = vst [vmem:[%s143 + $0xc] sm:$0xf] %v150
                %v152 = vld [vmem:[%s142 + $0x30] sm:$0xf]
                %153 = vst [vmem:[%s143 + $0x10] sm:$0xf] %v152
                %v154 = vld [vmem:[%s142 + $0x3c] sm:$0xf]
                %155 = vst [vmem:[%s143 + $0x14] sm:$0xf] %v154
                %v156 = vld [vmem:[%s142 + $0x48] sm:$0xf]
                %157 = vst [vmem:[%s143 + $0x18] sm:$0xf] %v156
                %v158 = vld [vmem:[%s142 + $0x54] sm:$0xf]
                %159 = vst [vmem:[%s143 + $0x1c] sm:$0xf] %v158
                %v160 = vld [vmem:[%s142 + $0x60] sm:$0xf]
                %161 = vst [vmem:[%s143 + $0x20] sm:$0xf] %v160
                %v162 = vld [vmem:[%s142 + $0x6c] sm:$0xf]
                %163 = vst [vmem:[%s143 + $0x24] sm:$0xf] %v162
                %v164 = vld [vmem:[%s142 + $0x78] sm:$0xf]
                %165 = vst [vmem:[%s143 + $0x28] sm:$0xf] %v164
                %v166 = vld [vmem:[%s142 + $0x84] sm:$0xf]
                %167 = vst [vmem:[%s143 + $0x2c] sm:$0xf] %v166
                %v168 = vld [vmem:[%s142 + $0x90] sm:$0xf]
                %169 = vst [vmem:[%s143 + $0x30] sm:$0xf] %v168
                %v170 = vld [vmem:[%s142 + $0x9c] sm:$0xf]
                %171 = vst [vmem:[%s143 + $0x34] sm:$0xf] %v170
                %v172 = vld [vmem:[%s142 + $0xa8] sm:$0xf]
                %173 = vst [vmem:[%s143 + $0x38] sm:$0xf] %v172
                %v174 = vld [vmem:[%s142 + $0xb4] sm:$0xf]
                %175 = vst [vmem:[%s143 + $0x3c] sm:$0xf] %v174
              $region41: #{gcn_forward.3} parent=35 // loop_footer
                %s141 = sadd.s32 1, %s137
              $region42: #{gcn_forward.3} parent=35 // loop_footer_branch
                %136 = sbr.rel target = $region38
              $region43: #{gcn_forward.3} parent=35 // loop_exit
                _
            $region36: #{gcn_forward.3} parent=27 // pred_fallthru
              _
          $region28: #{gcn_forward.3} parent=23 // pred_fallthru
            _
          %227 = vnop
        $region24: #{gcn_forward.3} parent=19 // pred_fallthru
          _
      $region20: #{gcn_forward.3} parent=5 // pred_fallthru
        _
      %p228 = scmp.le.s32.totalorder 1, %s8
      %p229 = scmp.lt.s32.totalorder %s8, 10
      %p230 = pnand %p228, %p229
      %p231 = pneg %p230
      // Predicated region
      $region62: #{gcn_forward.3} parent=5 // pred_check
        _
      $region63: #{gcn_forward.3} parent=5 // pred_check_branch
        %233 = sbr.rel (%p230) target = $region65
      $region64: #{gcn_forward.3} parent=5 // pred_region
        %s234 = ssub.s32 %s8, 1
        %s235 = sand.u32 %s35, 1
        %s236 = sand.u32 %s35, 1
        %s237 = smul.addr %s236, 64
        %s238 = scalar_lea.vmem [#allocation3], %s237
        // Predicated region
        $region66: #{gcn_forward.3} parent=64 // pred_check
          %p239 = pneg %p48
        $region67: #{gcn_forward.3} parent=64 // pred_check_branch
          %241 = sbr.rel (%p239) target = $region69
        $region68: #{gcn_forward.3} parent=64 // pred_region
          _
        $region69: #{gcn_forward.3} parent=64 // pred_fallthru
          _
        %s242 = sand.u32 %s35, 1
        %s243 = sand.u32 %s35, 1
        %s244 = smul.addr %s243, 64
        %s245 = scalar_lea.vmem [#allocation3], %s244
        %p246 = pneg %p48
        %p247 = pneg %p45
        %p248 = pneg %p69
        %p249 = pneg %p66
        %p250 = pneg %p95
        %p251 = pneg %p92
        %s252 = smul.u32 16, %s17
        %p253 = scmp.lt.s32.totalorder %s252, 47
        %s254 = scalar_select %p253, %s252, 47
        %s255 = smul.addr %s254, 8
        %s256 = scalar_lea.vmem %s2, %s255
        %s257 = smul.u32 16, %s17
        %s258 = smul.u32 16, %s17
        %p259 = scmp.lt.s32.totalorder %s258, 47
        %s260 = scalar_select %p259, %s258, 47
        %s261 = smul.addr %s260, 8
        %s262 = scalar_lea.vmem %s2, %s261
        %s263 = smul.u32 16, %s17
        %p265 = scmp.eq.s32.totalorder %s18, 0
        // Predicated region
        $region70: #{gcn_forward.3} parent=64 // pred_check
          %p266 = pneg %p265
        $region71: #{gcn_forward.3} parent=64 // pred_check_branch
          %268 = sbr.rel (%p266) target = $region73
        $region72: #{gcn_forward.3} parent=64 // pred_region
          %269 = vst [vmem:[#allocation2] sm:$0xff] 0.0
          %270 = vst [vmem:[#allocation2 + $0x8] sm:$0xff] 0.0
          %271 = vst [vmem:[#allocation2 + $0x10] sm:$0xff] 0.0
          %272 = vst [vmem:[#allocation2 + $0x18] sm:$0xff] 0.0
          %273 = vst [vmem:[#allocation2 + $0x20] sm:$0xff] 0.0
          %274 = vst [vmem:[#allocation2 + $0x28] sm:$0xff] 0.0
          %275 = vst [vmem:[#allocation2 + $0x30] sm:$0xff] 0.0
          %276 = vst [vmem:[#allocation2 + $0x38] sm:$0xff] 0.0
          %277 = vst [vmem:[#allocation2 + $0x40] sm:$0xff] 0.0
          %278 = vst [vmem:[#allocation2 + $0x48] sm:$0xff] 0.0
          %279 = vst [vmem:[#allocation2 + $0x50] sm:$0xff] 0.0
          %280 = vst [vmem:[#allocation2 + $0x58] sm:$0xff] 0.0
          %281 = vst [vmem:[#allocation2 + $0x60] sm:$0xff] 0.0
          %282 = vst [vmem:[#allocation2 + $0x68] sm:$0xff] 0.0
          %283 = vst [vmem:[#allocation2 + $0x70] sm:$0xff] 0.0
          %284 = vst [vmem:[#allocation2 + $0x78] sm:$0xff] 0.0
        $region73: #{gcn_forward.3} parent=64 // pred_fallthru
          _
        %s285 = smul.u32 %s18, 128
        %v286 = vld [vmem:[#allocation2] sm:$0xff]
        %v287 = vld [vmem:[#allocation2 + $0x8] sm:$0xff]
        %v288 = vld [vmem:[#allocation2 + $0x10] sm:$0xff]
        %v289 = vld [vmem:[#allocation2 + $0x18] sm:$0xff]
        %v290 = vld [vmem:[#allocation2 + $0x20] sm:$0xff]
        %v291 = vld [vmem:[#allocation2 + $0x28] sm:$0xff]
        %v292 = vld [vmem:[#allocation2 + $0x30] sm:$0xff]
        %v293 = vld [vmem:[#allocation2 + $0x38] sm:$0xff]
        %v294 = vld [vmem:[#allocation2 + $0x40] sm:$0xff]
        %v295 = vld [vmem:[#allocation2 + $0x48] sm:$0xff]
        %v296 = vld [vmem:[#allocation2 + $0x50] sm:$0xff]
        %v297 = vld [vmem:[#allocation2 + $0x58] sm:$0xff]
        %v298 = vld [vmem:[#allocation2 + $0x60] sm:$0xff]
        %v299 = vld [vmem:[#allocation2 + $0x68] sm:$0xff]
        %v300 = vld [vmem:[#allocation2 + $0x70] sm:$0xff]
        %v301 = vld [vmem:[#allocation2 + $0x78] sm:$0xff]
        %v302 = vld [vmem:[%s238] sm:$0xf]
        %v303 = vld [vmem:[%s238 + $0x4] sm:$0xf]
        %v304 = vld [vmem:[%s238 + $0x8] sm:$0xf]
        %v305 = vld [vmem:[%s238 + $0xc] sm:$0xf]
        %v306 = vld [vmem:[%s238 + $0x10] sm:$0xf]
        %v307 = vld [vmem:[%s238 + $0x14] sm:$0xf]
        %v308 = vld [vmem:[%s238 + $0x18] sm:$0xf]
        %v309 = vld [vmem:[%s238 + $0x1c] sm:$0xf]
        %v310 = vld [vmem:[%s238 + $0x20] sm:$0xf]
        %v311 = vld [vmem:[%s238 + $0x24] sm:$0xf]
        %v312 = vld [vmem:[%s238 + $0x28] sm:$0xf]
        %v313 = vld [vmem:[%s238 + $0x2c] sm:$0xf]
        %v314 = vld [vmem:[%s238 + $0x30] sm:$0xf]
        %v315 = vld [vmem:[%s238 + $0x34] sm:$0xf]
        %v316 = vld [vmem:[%s238 + $0x38] sm:$0xf]
        %v317 = vld [vmem:[%s238 + $0x3c] sm:$0xf]
        %s318 = sshra.s32 %s285, 3
        %s319 = sand.u32 %s285, 7
        %s320 = smul.addr %s318, 4
        %s321 = scalar_lea.vmem %s1, %s320
        %v322 = vld [vmem:[%s321] sm:$0xf]
        %v323 = vld [vmem:[%s321 + $0x4] sm:$0xf]
        %v324 = vld [vmem:[%s321 + $0x8] sm:$0xf]
        %v325 = vld [vmem:[%s321 + $0xc] sm:$0xf]
        %v326 = vld [vmem:[%s321 + $0x10] sm:$0xf]
        %v327 = vld [vmem:[%s321 + $0x14] sm:$0xf]
        %v328 = vld [vmem:[%s321 + $0x18] sm:$0xf]
        %v329 = vld [vmem:[%s321 + $0x1c] sm:$0xf]
        %v330 = vld [vmem:[%s321 + $0x20] sm:$0xf]
        %v331 = vld [vmem:[%s321 + $0x24] sm:$0xf]
        %v332 = vld [vmem:[%s321 + $0x28] sm:$0xf]
        %v333 = vld [vmem:[%s321 + $0x2c] sm:$0xf]
        %v334 = vld [vmem:[%s321 + $0x30] sm:$0xf]
        %v335 = vld [vmem:[%s321 + $0x34] sm:$0xf]
        %v336 = vld [vmem:[%s321 + $0x38] sm:$0xf]
        %v337 = vld [vmem:[%s321 + $0x3c] sm:$0xf]
        %v354 = vunpack.c.l.b16 %v302
        %v355 = vunpack.c.l.b16 %v303
        %v356 = vunpack.c.l.b16 %v304
        %v357 = vunpack.c.l.b16 %v305
        %v358 = vunpack.c.l.b16 %v306
        %v359 = vunpack.c.l.b16 %v307
        %v360 = vunpack.c.l.b16 %v308
        %v361 = vunpack.c.l.b16 %v309
        %v362 = vunpack.c.l.b16 %v310
        %v363 = vunpack.c.l.b16 %v311
        %v364 = vunpack.c.l.b16 %v312
        %v365 = vunpack.c.l.b16 %v313
        %v366 = vunpack.c.l.b16 %v314
        %v367 = vunpack.c.l.b16 %v315
        %v368 = vunpack.c.l.b16 %v316
        %v369 = vunpack.c.l.b16 %v317
        %v370 = vpack.c.b16 %v355, %v354
        %v371 = vpack.c.b16 %v357, %v356
        %v372 = vpack.c.b16 %v359, %v358
        %v373 = vpack.c.b16 %v361, %v360
        %v374 = vpack.c.b16 %v363, %v362
        %v375 = vpack.c.b16 %v365, %v364
        %v376 = vpack.c.b16 %v367, %v366
        %v377 = vpack.c.b16 %v369, %v368
        %v402 = vunpack.c.l.b16 %v322
        %v403 = vunpack.c.l.b16 %v323
        %v404 = vunpack.c.l.b16 %v324
        %v405 = vunpack.c.l.b16 %v325
        %v406 = vunpack.c.l.b16 %v326
        %v407 = vunpack.c.l.b16 %v327
        %v408 = vunpack.c.l.b16 %v328
        %v409 = vunpack.c.l.b16 %v329
        %v410 = vunpack.c.l.b16 %v330
        %v411 = vunpack.c.l.b16 %v331
        %v412 = vunpack.c.l.b16 %v332
        %v413 = vunpack.c.l.b16 %v333
        %v414 = vunpack.c.l.b16 %v334
        %v415 = vunpack.c.l.b16 %v335
        %v416 = vunpack.c.l.b16 %v336
        %v417 = vunpack.c.l.b16 %v337
        %v418 = vpack.c.b16 %v403, %v402
        %v419 = vpack.c.b16 %v405, %v404
        %v420 = vpack.c.b16 %v407, %v406
        %v421 = vpack.c.b16 %v409, %v408
        %v422 = vpack.c.b16 %v411, %v410
        %v423 = vpack.c.b16 %v413, %v412
        %v424 = vpack.c.b16 %v415, %v414
        %v425 = vpack.c.b16 %v417, %v416
        %434 = vmatprep.subr.bf16.mxu0 0
        %435 = vmatpush1.bf16.msra.mxu0 %v418
        %436 = vmatprep.subr.bf16.mxu0 0
        %437 = vmatpush1.bf16.msra.mxu0 %v419
        %438 = vmatprep.subr.bf16.mxu0 0
        %439 = vmatpush1.bf16.msra.mxu0 %v420
        %440 = vmatprep.subr.bf16.mxu0 0
        %441 = vmatpush1.bf16.msra.mxu0 %v421
        %442 = vmatprep.subr.bf16.mxu0 0
        %443 = vmatpush1.bf16.msra.mxu0 %v422
        %444 = vmatprep.subr.bf16.mxu0 0
        %445 = vmatpush1.bf16.msra.mxu0 %v423
        %446 = vmatprep.subr.bf16.mxu0 0
        %447 = vmatpush1.bf16.msra.mxu0 %v424
        %448 = vmatprep.subr.bf16.mxu0 0
        %449 = vmatpush1.bf16.msra.mxu0 %v425
        %450 = vmatprep.subr.bf16.mxu0 0
        %451 = vmatpush1.bf16.msra.mxu0 0
        %452 = vmatprep.subr.bf16.mxu0 0
        %453 = vmatpush1.bf16.msra.mxu0 0
        %454 = vmatprep.subr.bf16.mxu0 0
        %455 = vmatpush1.bf16.msra.mxu0 0
        %456 = vmatprep.subr.bf16.mxu0 0
        %457 = vmatpush1.bf16.msra.mxu0 0
        %458 = vmatprep.subr.bf16.mxu0 0
        %459 = vmatpush1.bf16.msra.mxu0 0
        %460 = vmatprep.subr.bf16.mxu0 0
        %461 = vmatpush1.bf16.msra.mxu0 0
        %462 = vmatprep.subr.bf16.mxu0 0
        %463 = vmatpush1.bf16.msra.mxu0 0
        %464 = vmatprep.subr.bf16.mxu0 0
        %465 = vmatpush1.bf16.msra.mxu0 0
        %466 = vmatprep.mubr.bf16.mxu0 0
        %467 = vmatmul.mubr.bf16.gmra.mrb[0].mxu0 %v370
        %v468 = vpop.f32.mrb[0].mxu0
        %v469 = vadd.f32 0.0, %v468
        %v470 = vpop.f32.mrb[0].mxu0
        %v471 = vpop.f32.mrb[0].mxu0
        %v472 = vadd.f32 0.0, %v471
        %v473 = vpop.f32.mrb[0].mxu0
        %474 = vmatprep.mubr.bf16.mxu0 0
        %475 = vmatmul.mubr.bf16.gmra.mrb[0].mxu0 %v371
        %v476 = vpop.f32.mrb[0].mxu0
        %v477 = vadd.f32 0.0, %v476
        %v478 = vpop.f32.mrb[0].mxu0
        %v479 = vpop.f32.mrb[0].mxu0
        %v480 = vadd.f32 0.0, %v479
        %v481 = vpop.f32.mrb[0].mxu0
        %482 = vmatprep.mubr.bf16.mxu0 0
        %483 = vmatmul.mubr.bf16.gmra.mrb[0].mxu0 %v372
        %v484 = vpop.f32.mrb[0].mxu0
        %v485 = vadd.f32 0.0, %v484
        %v486 = vpop.f32.mrb[0].mxu0
        %v487 = vpop.f32.mrb[0].mxu0
        %v488 = vadd.f32 0.0, %v487
        %v489 = vpop.f32.mrb[0].mxu0
        %490 = vmatprep.mubr.bf16.mxu0 0
        %491 = vmatmul.mubr.bf16.gmra.mrb[0].mxu0 %v373
        %v492 = vpop.f32.mrb[0].mxu0
        %v493 = vadd.f32 0.0, %v492
        %v494 = vpop.f32.mrb[0].mxu0
        %v495 = vpop.f32.mrb[0].mxu0
        %v496 = vadd.f32 0.0, %v495
        %v497 = vpop.f32.mrb[0].mxu0
        %498 = vmatprep.mubr.bf16.mxu0 0
        %499 = vmatmul.mubr.bf16.gmra.mrb[0].mxu0 %v374
        %v500 = vpop.f32.mrb[0].mxu0
        %v501 = vadd.f32 0.0, %v500
        %v502 = vpop.f32.mrb[0].mxu0
        %v503 = vpop.f32.mrb[0].mxu0
        %v504 = vadd.f32 0.0, %v503
        %v505 = vpop.f32.mrb[0].mxu0
        %506 = vmatprep.mubr.bf16.mxu0 0
        %507 = vmatmul.mubr.bf16.gmra.mrb[0].mxu0 %v375
        %v508 = vpop.f32.mrb[0].mxu0
        %v509 = vadd.f32 0.0, %v508
        %v510 = vpop.f32.mrb[0].mxu0
        %v511 = vpop.f32.mrb[0].mxu0
        %v512 = vadd.f32 0.0, %v511
        %v513 = vpop.f32.mrb[0].mxu0
        %514 = vmatprep.mubr.bf16.mxu0 0
        %515 = vmatmul.mubr.bf16.gmra.mrb[0].mxu0 %v376
        %v516 = vpop.f32.mrb[0].mxu0
        %v517 = vadd.f32 0.0, %v516
        %v518 = vpop.f32.mrb[0].mxu0
        %v519 = vpop.f32.mrb[0].mxu0
        %v520 = vadd.f32 0.0, %v519
        %v521 = vpop.f32.mrb[0].mxu0
        %522 = vmatprep.mubr.bf16.mxu0 0
        %523 = vmatmul.mubr.bf16.gmra.mrb[0].mxu0 %v377
        %v524 = vpop.f32.mrb[0].mxu0
        %v525 = vadd.f32 0.0, %v524
        %v526 = vpop.f32.mrb[0].mxu0
        %v527 = vpop.f32.mrb[0].mxu0
        %v528 = vadd.f32 0.0, %v527
        %v529 = vpop.f32.mrb[0].mxu0
        %530 = vdwg.mxu0
        %v531 = vadd.f32 %v286, %v469
        %v532 = vadd.f32 %v287, %v472
        %v533 = vadd.f32 %v288, %v477
        %v534 = vadd.f32 %v289, %v480
        %v535 = vadd.f32 %v290, %v485
        %v536 = vadd.f32 %v291, %v488
        %v537 = vadd.f32 %v292, %v493
        %v538 = vadd.f32 %v293, %v496
        %v539 = vadd.f32 %v294, %v501
        %v540 = vadd.f32 %v295, %v504
        %v541 = vadd.f32 %v296, %v509
        %v542 = vadd.f32 %v297, %v512
        %v543 = vadd.f32 %v298, %v517
        %v544 = vadd.f32 %v299, %v520
        %v545 = vadd.f32 %v300, %v525
        %v546 = vadd.f32 %v301, %v528
        %547 = vst [vmem:[#allocation2] sm:$0xff] %v531
        %548 = vst [vmem:[#allocation2 + $0x8] sm:$0xff] %v532
        %549 = vst [vmem:[#allocation2 + $0x10] sm:$0xff] %v533
        %550 = vst [vmem:[#allocation2 + $0x18] sm:$0xff] %v534
        %551 = vst [vmem:[#allocation2 + $0x20] sm:$0xff] %v535
        %552 = vst [vmem:[#allocation2 + $0x28] sm:$0xff] %v536
        %553 = vst [vmem:[#allocation2 + $0x30] sm:$0xff] %v537
        %554 = vst [vmem:[#allocation2 + $0x38] sm:$0xff] %v538
        %555 = vst [vmem:[#allocation2 + $0x40] sm:$0xff] %v539
        %556 = vst [vmem:[#allocation2 + $0x48] sm:$0xff] %v540
        %557 = vst [vmem:[#allocation2 + $0x50] sm:$0xff] %v541
        %558 = vst [vmem:[#allocation2 + $0x58] sm:$0xff] %v542
        %559 = vst [vmem:[#allocation2 + $0x60] sm:$0xff] %v543
        %560 = vst [vmem:[#allocation2 + $0x68] sm:$0xff] %v544
        %561 = vst [vmem:[#allocation2 + $0x70] sm:$0xff] %v545
        %562 = vst [vmem:[#allocation2 + $0x78] sm:$0xff] %v546
        %p563 = scmp.eq.s32.totalorder %s18, 2
        // Predicated region
        $region74: #{gcn_forward.3} parent=64 // pred_check
          %p564 = pneg %p563
        $region75: #{gcn_forward.3} parent=64 // pred_check_branch
          %566 = sbr.rel (%p564) target = $region77
        $region76: #{gcn_forward.3} parent=64 // pred_region
          %v567 = vld [vmem:[#allocation2] sm:$0xff]
          %v568 = vld [vmem:[#allocation2 + $0x8] sm:$0xff]
          %v569 = vld [vmem:[#allocation2 + $0x10] sm:$0xff]
          %v570 = vld [vmem:[#allocation2 + $0x18] sm:$0xff]
          %v571 = vld [vmem:[#allocation2 + $0x20] sm:$0xff]
          %v572 = vld [vmem:[#allocation2 + $0x28] sm:$0xff]
          %v573 = vld [vmem:[#allocation2 + $0x30] sm:$0xff]
          %v574 = vld [vmem:[#allocation2 + $0x38] sm:$0xff]
          %v575 = vld [vmem:[#allocation2 + $0x40] sm:$0xff]
          %v576 = vld [vmem:[#allocation2 + $0x48] sm:$0xff]
          %v577 = vld [vmem:[#allocation2 + $0x50] sm:$0xff]
          %v578 = vld [vmem:[#allocation2 + $0x58] sm:$0xff]
          %v579 = vld [vmem:[#allocation2 + $0x60] sm:$0xff]
          %v580 = vld [vmem:[#allocation2 + $0x68] sm:$0xff]
          %v581 = vld [vmem:[#allocation2 + $0x70] sm:$0xff]
          %v582 = vld [vmem:[#allocation2 + $0x78] sm:$0xff]
          %583 = vst [vmem:[%s262] sm:$0xff] %v567
          %584 = vst [vmem:[%s262 + $0x8] sm:$0xff] %v568
          %585 = vst [vmem:[%s262 + $0x10] sm:$0xff] %v569
          %586 = vst [vmem:[%s262 + $0x18] sm:$0xff] %v570
          %587 = vst [vmem:[%s262 + $0x20] sm:$0xff] %v571
          %588 = vst [vmem:[%s262 + $0x28] sm:$0xff] %v572
          %589 = vst [vmem:[%s262 + $0x30] sm:$0xff] %v573
          %590 = vst [vmem:[%s262 + $0x38] sm:$0xff] %v574
          %591 = vst [vmem:[%s262 + $0x40] sm:$0xff] %v575
          %592 = vst [vmem:[%s262 + $0x48] sm:$0xff] %v576
          %593 = vst [vmem:[%s262 + $0x50] sm:$0xff] %v577
          %594 = vst [vmem:[%s262 + $0x58] sm:$0xff] %v578
          %595 = vst [vmem:[%s262 + $0x60] sm:$0xff] %v579
          %596 = vst [vmem:[%s262 + $0x68] sm:$0xff] %v580
          %597 = vst [vmem:[%s262 + $0x70] sm:$0xff] %v581
          %598 = vst [vmem:[%s262 + $0x78] sm:$0xff] %v582
        $region77: #{gcn_forward.3} parent=64 // pred_fallthru
          _
        %s599 = smul.u32 16, %s17
        %p600 = scmp.lt.s32.totalorder %s599, 47
        %s601 = scalar_select %p600, %s599, 47
        %s602 = smul.addr %s601, 8
        %s603 = scalar_lea.vmem %s2, %s602
        // Predicated region
        $region78: #{gcn_forward.3} parent=64 // pred_check
          %p604 = pneg %p92
        $region79: #{gcn_forward.3} parent=64 // pred_check_branch
          %606 = sbr.rel (%p604) target = $region81
        $region80: #{gcn_forward.3} parent=64 // pred_region
          %s607 = smul.u32 16, %s17
        $region81: #{gcn_forward.3} parent=64 // pred_fallthru
          _
      $region65: #{gcn_forward.3} parent=5 // pred_fallthru
        _
      %p608 = scmp.le.s32.totalorder 2, %s8
      // Predicated region
      $region82: #{gcn_forward.3} parent=5 // pred_check
        %p609 = pneg %p608
      $region83: #{gcn_forward.3} parent=5 // pred_check_branch
        %611 = sbr.rel (%p609) target = $region85
      $region84: #{gcn_forward.3} parent=5 // pred_region
        %s612 = ssub.s32 %s8, 2
        // Predicated region
        $region86: #{gcn_forward.3} parent=84 // pred_check
          %p613 = pneg %p98
        $region87: #{gcn_forward.3} parent=84 // pred_check_branch
          %615 = sbr.rel (%p613) target = $region89
        $region88: #{gcn_forward.3} parent=84 // pred_region
          %s616 = smul.u32 16, %s19
          %p617 = scmp.lt.s32.totalorder %s616, 47
          %s618 = scalar_select %p617, %s616, 47
          %s619 = smul.addr %s618, 8
          %s620 = scalar_lea.vmem %s2, %s619
        $region89: #{gcn_forward.3} parent=84 // pred_fallthru
          _
      $region85: #{gcn_forward.3} parent=5 // pred_fallthru
        _
    $region6: #{gcn_forward.3} parent=1 // loop_footer
      %s12 = sadd.s32 1, %s8
    $region7: #{gcn_forward.3} parent=1 // loop_footer_branch
      %7 = sbr.rel target = $region3
    $region8: #{gcn_forward.3} parent=1 // loop_exit
      _

// kernel: gcn_forward.2
$region0: #{gcn_forward.2}
  #allocation0 [shape = 'u32[]', space=smem, size = 0x4, offset = 0x4, fixed_abs, tag = 'smem constant byte address 0x4 - core index']
  #allocation1 [shape = 'u32[144,128]{1,0:T(1,128)}', space=vmem, size = 0x12000, scoped, tag = 'internal scratch']
  #allocation2 [shape = 'f32[128,128]{1,0:T(8,128)}', space=vmem, size = 0x10000, scoped, tag = 'scratch operand']
  %s0 = inlined_call_operand.vmem [shape: bf16[384,384], index: 0, kind: input, shape index: {}]
  %s1 = inlined_call_operand.vmem [shape: bf16[384,128], index: 1, kind: input, shape index: {}]
  %s2 = inlined_call_operand.vmem [shape: f32[128,128], index: 2, kind: input, shape index: {}]
  %s3 = inlined_call_operand.vmem [shape: f32[128,128], index: 3, kind: input, shape index: {}]
  %s4 = inlined_call_operand.vmem [shape: bf16[384,128], index: 4, kind: output, shape index: {}]
  %s5 = sld [smem:[#allocation0]]
  $region98: #{gcn_forward.2} parent=0
    _
  %s7 = ssub.s32 1, %s5
  %s8 = scalar_select 0, %s7, %s5
  $region1: #{gcn_forward.2} parent=0
    #allocation3 [shape = 'u8[65536]{0}', space=vmem, size = 0x10000, scoped, tag = 'input window, operand 0']
    loop: start=0, step=1, limit=11
    $region2: #{gcn_forward.2} parent=1 // loop_pre_header
      _
    $region3: #{gcn_forward.2} parent=1 // loop_header
      %s10 = sphi 0, %s14
      %p11 = scmp.ge.s32.totalorder %s10, 11
      %s17 = sphi 0, %s29
      %s18 = sphi 0, %s25
      %s19 = sphi 0, %s17
      %s20 = sphi 0, %s18
      %s21 = sphi 0, %s19
      %s22 = sphi 0, %s20
      %s34 = sphi 0, %s36
      %s37 = sphi 0, %s34
      %s38 = sphi 0, %s37
      %s54 = sphi 0, %s38
      %s58 = sphi 0, %s58
      %s60 = sphi 0, %s58
      %s61 = sphi 0, %s60
      %s75 = sphi 0, %s61
      %s79 = sphi 0, %s79
      %s81 = sphi 0, %s79
      %s82 = sphi 0, %s81
      %s96 = sphi 0, %s82
      %s100 = sphi 0, %s100
      %s102 = sphi 0, %s100
      %s103 = sphi 0, %s102
      %s117 = sphi 0, %s103
      %s123 = sphi 0, %s125
      %s126 = sphi 0, %s123
      %s127 = sphi 0, %s126
      %s143 = sphi 0, %s127
    $region4: #{gcn_forward.2} parent=1 // loop_header_branch
      %13 = sbr.rel (%p11) target = $region8
    $region5: #{gcn_forward.2} parent=1 // loop_body
      %s15 = ssub.s32 %s10, 1
      %s16 = ssub.s32 %s10, 2
      %s23 = sadd.s32 1, %s18
      %p24 = scmp.ge.s32.totalorder %s23, 3
      %s25 = scalar_select %p24, 0, %s23
      %s26 = sadd.s32 1, %s17
      %s27 = scalar_select %p24, %s26, %s17
      %p28 = scmp.ge.s32.totalorder %s27, 3
      %s29 = scalar_select %p28, 0, %s27
      %s30 = ssub.s32 %s17, %s29
      %s31 = ssub.s32 %s18, %s25
      %s32 = sor.u32 %s30, %s31
      %p33 = scmp.eq.s32.totalorder %s32, 0
      %s35 = sadd.s32 %s34, 1
      %s36 = scalar_select %p33, %s34, %s35
      %p39 = pneg %p33
      %p40 = scmp.eq.s32.totalorder %s10, 8
      %p41 = por %p39, %p40
      %p42 = scmp.ne.s32.totalorder %s34, %s37
      %p43 = scmp.eq.s32.totalorder %s10, 0
      %p44 = por %p42, %p43
      %p45 = scmp.ne.s32.totalorder %s34, %s37
      %p46 = scmp.eq.s32.totalorder %s15, 8
      %p47 = por %p45, %p46
      %p48 = scmp.ne.s32.totalorder %s37, %s38
      %p49 = scmp.eq.s32.totalorder %s15, 0
      %p50 = por %p48, %p49
      %p51 = scmp.ne.s32.totalorder %s37, %s38
      %p52 = scmp.eq.s32.totalorder %s16, 8
      %p53 = por %p51, %p52
      %p55 = scmp.ne.s32.totalorder %s38, %s54
      %p56 = scmp.eq.s32.totalorder %s16, 0
      %p57 = por %p55, %p56
      %s59 = sadd.s32 %s58, 1
      %p62 = scmp.eq.s32.totalorder %s10, 8
      %p63 = scmp.ne.s32.totalorder %s58, %s60
      %p64 = scmp.eq.s32.totalorder %s10, 0
      %p65 = por %p63, %p64
      %p66 = scmp.ne.s32.totalorder %s58, %s60
      %p67 = scmp.eq.s32.totalorder %s15, 8
      %p68 = por %p66, %p67
      %p69 = scmp.ne.s32.totalorder %s60, %s61
      %p70 = scmp.eq.s32.totalorder %s15, 0
      %p71 = por %p69, %p70
      %p72 = scmp.ne.s32.totalorder %s60, %s61
      %p73 = scmp.eq.s32.totalorder %s16, 8
      %p74 = por %p72, %p73
      %p76 = scmp.ne.s32.totalorder %s61, %s75
      %p77 = scmp.eq.s32.totalorder %s16, 0
      %p78 = por %p76, %p77
      %s80 = sadd.s32 %s79, 1
      %p83 = scmp.eq.s32.totalorder %s10, 8
      %p84 = scmp.ne.s32.totalorder %s79, %s81
      %p85 = scmp.eq.s32.totalorder %s10, 0
      %p86 = por %p84, %p85
      %p87 = scmp.ne.s32.totalorder %s79, %s81
      %p88 = scmp.eq.s32.totalorder %s15, 8
      %p89 = por %p87, %p88
      %p90 = scmp.ne.s32.totalorder %s81, %s82
      %p91 = scmp.eq.s32.totalorder %s15, 0
      %p92 = por %p90, %p91
      %p93 = scmp.ne.s32.totalorder %s81, %s82
      %p94 = scmp.eq.s32.totalorder %s16, 8
      %p95 = por %p93, %p94
      %p97 = scmp.ne.s32.totalorder %s82, %s96
      %p98 = scmp.eq.s32.totalorder %s16, 0
      %p99 = por %p97, %p98
      %s101 = sadd.s32 %s100, 1
      %p104 = scmp.eq.s32.totalorder %s10, 8
      %p105 = scmp.ne.s32.totalorder %s100, %s102
      %p106 = scmp.eq.s32.totalorder %s10, 0
      %p107 = por %p105, %p106
      %p108 = scmp.ne.s32.totalorder %s100, %s102
      %p109 = scmp.eq.s32.totalorder %s15, 8
      %p110 = por %p108, %p109
      %p111 = scmp.ne.s32.totalorder %s102, %s103
      %p112 = scmp.eq.s32.totalorder %s15, 0
      %p113 = por %p111, %p112
      %p114 = scmp.ne.s32.totalorder %s102, %s103
      %p115 = scmp.eq.s32.totalorder %s16, 8
      %p116 = por %p114, %p115
      %p118 = scmp.ne.s32.totalorder %s103, %s117
      %p119 = scmp.eq.s32.totalorder %s16, 0
      %p120 = por %p118, %p119
      %s121 = ssub.s32 %s17, %s29
      %p122 = scmp.eq.s32.totalorder %s121, 0
      %s124 = sadd.s32 %s123, 1
      %s125 = scalar_select %p122, %s123, %s124
      %p128 = pneg %p122
      %p129 = scmp.eq.s32.totalorder %s10, 8
      %p130 = por %p128, %p129
      %p131 = scmp.ne.s32.totalorder %s123, %s126
      %p132 = scmp.eq.s32.totalorder %s10, 0
      %p133 = por %p131, %p132
      %p134 = scmp.ne.s32.totalorder %s123, %s126
      %p135 = scmp.eq.s32.totalorder %s15, 8
      %p136 = por %p134, %p135
      %p137 = scmp.ne.s32.totalorder %s126, %s127
      %p138 = scmp.eq.s32.totalorder %s15, 0
      %p139 = por %p137, %p138
      %p140 = scmp.ne.s32.totalorder %s126, %s127
      %p141 = scmp.eq.s32.totalorder %s16, 8
      %p142 = por %p140, %p141
      %p144 = scmp.ne.s32.totalorder %s127, %s143
      %p145 = scmp.eq.s32.totalorder %s16, 0
      %p146 = por %p144, %p145
      %p147 = scmp.le.s32.totalorder 1, %s10
      %p148 = scmp.lt.s32.totalorder %s10, 10
      %p149 = pnand %p147, %p148
      %p150 = pneg %p149
      // Predicated region
      $region9: #{gcn_forward.2} parent=5 // pred_check
        _
      $region10: #{gcn_forward.2} parent=5 // pred_check_branch
        %152 = sbr.rel (%p149) target = $region12
      $region11: #{gcn_forward.2} parent=5 // pred_region
        %s153 = ssub.s32 %s10, 1
        // Predicated region
        $region13: #{gcn_forward.2} parent=11 // pred_check
          %p154 = pneg %p71
        $region14: #{gcn_forward.2} parent=11 // pred_check_branch
          %156 = sbr.rel (%p154) target = $region16
        $region15: #{gcn_forward.2} parent=11 // pred_region
          _
        $region16: #{gcn_forward.2} parent=11 // pred_fallthru
          _
        // Predicated region
        $region17: #{gcn_forward.2} parent=11 // pred_check
          %p157 = pneg %p92
        $region18: #{gcn_forward.2} parent=11 // pred_check_branch
          %159 = sbr.rel (%p157) target = $region20
        $region19: #{gcn_forward.2} parent=11 // pred_region
          _
        $region20: #{gcn_forward.2} parent=11 // pred_fallthru
          _
        // Predicated region
        $region21: #{gcn_forward.2} parent=11 // pred_check
          %p160 = pneg %p113
        $region22: #{gcn_forward.2} parent=11 // pred_check_branch
          %162 = sbr.rel (%p160) target = $region24
        $region23: #{gcn_forward.2} parent=11 // pred_region
          _
        $region24: #{gcn_forward.2} parent=11 // pred_fallthru
          _
      $region12: #{gcn_forward.2} parent=5 // pred_fallthru
        _
      %p163 = scmp.lt.s32.totalorder %s10, 9
      // Predicated region
      $region25: #{gcn_forward.2} parent=5 // pred_check
        %p164 = pneg %p163
      $region26: #{gcn_forward.2} parent=5 // pred_check_branch
        %166 = sbr.rel (%p164) target = $region28
      $region27: #{gcn_forward.2} parent=5 // pred_region
        // Predicated region
        $region29: #{gcn_forward.2} parent=27 // pred_check
          %p167 = pneg %p44
        $region30: #{gcn_forward.2} parent=27 // pred_check_branch
          %169 = sbr.rel (%p167) target = $region32
        $region31: #{gcn_forward.2} parent=27 // pred_region
          %s170 = sand.u32 %s34, 1
          %s171 = sand.u32 %s34, 1
          %s172 = smul.addr %s171, 64
          %s173 = scalar_lea.vmem [#allocation3], %s172
          %s174 = smul.u32 16, %s17
          %s175 = smul.addr %s174, 3
          %s176 = sadd.s32 %s18, %s175
          %s177 = smul.addr %s176, 4
          %s178 = scalar_lea.vmem %s0, %s177
          // Predicated region
          $region33: #{gcn_forward.2} parent=31 // pred_check
            _
          $region34: #{gcn_forward.2} parent=31 // pred_check_branch
            %180 = sbr.rel (0) target = $region36
          $region35: #{gcn_forward.2} parent=31 // pred_region
            // Predicated region
            $region37: #{gcn_forward.2} parent=35 // pred_check
              _
            $region38: #{gcn_forward.2} parent=35 // pred_check_branch
              %182 = sbr.rel target = $region40
            $region39: #{gcn_forward.2} parent=35 // pred_region
              // Predicated region
              $region52: #{gcn_forward.2} parent=39 // pred_check
                _
              $region53: #{gcn_forward.2} parent=39 // pred_check_branch
                %227 = sbr.rel (0) target = $region55
              $region54: #{gcn_forward.2} parent=39 // pred_region
                loop: start=0, step=1, limit=1
                $region56: #{gcn_forward.2} parent=54 // loop_pre_header
                  _
                $region57: #{gcn_forward.2} parent=54 // loop_header
                  %s229 = sphi 0, %s233
                  %p230 = scmp.ge.s32.totalorder %s229, 1
                  %s234 = sphi %s178, %s178
                  %s235 = sphi %s173, %s173
                $region58: #{gcn_forward.2} parent=54 // loop_header_branch
                  %232 = sbr.rel (%p230) target = $region62
                $region59: #{gcn_forward.2} parent=54 // loop_body
                  _
                $region60: #{gcn_forward.2} parent=54 // loop_footer
                  %s233 = sadd.s32 1, %s229
                $region61: #{gcn_forward.2} parent=54 // loop_footer_branch
                  %228 = sbr.rel target = $region57
                $region62: #{gcn_forward.2} parent=54 // loop_exit
                  _
                loop: start=0, step=1, limit=1
                $region63: #{gcn_forward.2} parent=54 // loop_pre_header
                  _
                $region64: #{gcn_forward.2} parent=54 // loop_header
                  %s238 = sphi 0, %s242
                  %p239 = scmp.ge.s32.totalorder %s238, 1
                  %s243 = sphi %s178, %s178
                  %s244 = sphi %s173, %s173
                $region65: #{gcn_forward.2} parent=54 // loop_header_branch
                  %241 = sbr.rel (%p239) target = $region69
                $region66: #{gcn_forward.2} parent=54 // loop_body
                  %v245 = vld [vmem:[%s243] sm:$0xf]
                  %246 = vst [vmem:[%s244] sm:$0xf] %v245
                  %v247 = vld [vmem:[%s243 + $0xc] sm:$0xf]
                  %248 = vst [vmem:[%s244 + $0x4] sm:$0xf] %v247
                  %v249 = vld [vmem:[%s243 + $0x18] sm:$0xf]
                  %250 = vst [vmem:[%s244 + $0x8] sm:$0xf] %v249
                  %v251 = vld [vmem:[%s243 + $0x24] sm:$0xf]
                  %252 = vst [vmem:[%s244 + $0xc] sm:$0xf] %v251
                  %v253 = vld [vmem:[%s243 + $0x30] sm:$0xf]
                  %254 = vst [vmem:[%s244 + $0x10] sm:$0xf] %v253
                  %v255 = vld [vmem:[%s243 + $0x3c] sm:$0xf]
                  %256 = vst [vmem:[%s244 + $0x14] sm:$0xf] %v255
                  %v257 = vld [vmem:[%s243 + $0x48] sm:$0xf]
                  %258 = vst [vmem:[%s244 + $0x18] sm:$0xf] %v257
                  %v259 = vld [vmem:[%s243 + $0x54] sm:$0xf]
                  %260 = vst [vmem:[%s244 + $0x1c] sm:$0xf] %v259
                  %v261 = vld [vmem:[%s243 + $0x60] sm:$0xf]
                  %262 = vst [vmem:[%s244 + $0x20] sm:$0xf] %v261
                  %v263 = vld [vmem:[%s243 + $0x6c] sm:$0xf]
                  %264 = vst [vmem:[%s244 + $0x24] sm:$0xf] %v263
                  %v265 = vld [vmem:[%s243 + $0x78] sm:$0xf]
                  %266 = vst [vmem:[%s244 + $0x28] sm:$0xf] %v265
                  %v267 = vld [vmem:[%s243 + $0x84] sm:$0xf]
                  %268 = vst [vmem:[%s244 + $0x2c] sm:$0xf] %v267
                  %v269 = vld [vmem:[%s243 + $0x90] sm:$0xf]
                  %270 = vst [vmem:[%s244 + $0x30] sm:$0xf] %v269
                  %v271 = vld [vmem:[%s243 + $0x9c] sm:$0xf]
                  %272 = vst [vmem:[%s244 + $0x34] sm:$0xf] %v271
                  %v273 = vld [vmem:[%s243 + $0xa8] sm:$0xf]
                  %274 = vst [vmem:[%s244 + $0x38] sm:$0xf] %v273
                  %v275 = vld [vmem:[%s243 + $0xb4] sm:$0xf]
                  %276 = vst [vmem:[%s244 + $0x3c] sm:$0xf] %v275
                $region67: #{gcn_forward.2} parent=54 // loop_footer
                  %s242 = sadd.s32 1, %s238
                $region68: #{gcn_forward.2} parent=54 // loop_footer_branch
                  %237 = sbr.rel target = $region64
                $region69: #{gcn_forward.2} parent=54 // loop_exit
                  _
              $region55: #{gcn_forward.2} parent=39 // pred_fallthru
                _
            $region40: #{gcn_forward.2} parent=35 // pred_fallthru
              _
            // Predicated region
            $region41: #{gcn_forward.2} parent=35 // pred_check
              _
            $region42: #{gcn_forward.2} parent=35 // pred_check_branch
              %184 = sbr.rel (0) target = $region44
            $region43: #{gcn_forward.2} parent=35 // pred_region
              loop: start=0, step=1, limit=1
              $region45: #{gcn_forward.2} parent=43 // loop_pre_header
                _
              $region46: #{gcn_forward.2} parent=43 // loop_header
                %s187 = sphi 0, %s191
                %p188 = scmp.ge.s32.totalorder %s187, 1
                %s192 = sphi %s178, %s178
                %s193 = sphi %s173, %s173
              $region47: #{gcn_forward.2} parent=43 // loop_header_branch
                %190 = sbr.rel (%p188) target = $region51
              $region48: #{gcn_forward.2} parent=43 // loop_body
                %v194 = vld [vmem:[%s192] sm:$0xf]
                %195 = vst [vmem:[%s193] sm:$0xf] %v194
                %v196 = vld [vmem:[%s192 + $0xc] sm:$0xf]
                %197 = vst [vmem:[%s193 + $0x4] sm:$0xf] %v196
                %v198 = vld [vmem:[%s192 + $0x18] sm:$0xf]
                %199 = vst [vmem:[%s193 + $0x8] sm:$0xf] %v198
                %v200 = vld [vmem:[%s192 + $0x24] sm:$0xf]
                %201 = vst [vmem:[%s193 + $0xc] sm:$0xf] %v200
                %v202 = vld [vmem:[%s192 + $0x30] sm:$0xf]
                %203 = vst [vmem:[%s193 + $0x10] sm:$0xf] %v202
                %v204 = vld [vmem:[%s192 + $0x3c] sm:$0xf]
                %205 = vst [vmem:[%s193 + $0x14] sm:$0xf] %v204
                %v206 = vld [vmem:[%s192 + $0x48] sm:$0xf]
                %207 = vst [vmem:[%s193 + $0x18] sm:$0xf] %v206
                %v208 = vld [vmem:[%s192 + $0x54] sm:$0xf]
                %209 = vst [vmem:[%s193 + $0x1c] sm:$0xf] %v208
                %v210 = vld [vmem:[%s192 + $0x60] sm:$0xf]
                %211 = vst [vmem:[%s193 + $0x20] sm:$0xf] %v210
                %v212 = vld [vmem:[%s192 + $0x6c] sm:$0xf]
                %213 = vst [vmem:[%s193 + $0x24] sm:$0xf] %v212
                %v214 = vld [vmem:[%s192 + $0x78] sm:$0xf]
                %215 = vst [vmem:[%s193 + $0x28] sm:$0xf] %v214
                %v216 = vld [vmem:[%s192 + $0x84] sm:$0xf]
                %217 = vst [vmem:[%s193 + $0x2c] sm:$0xf] %v216
                %v218 = vld [vmem:[%s192 + $0x90] sm:$0xf]
                %219 = vst [vmem:[%s193 + $0x30] sm:$0xf] %v218
                %v220 = vld [vmem:[%s192 + $0x9c] sm:$0xf]
                %221 = vst [vmem:[%s193 + $0x34] sm:$0xf] %v220
                %v222 = vld [vmem:[%s192 + $0xa8] sm:$0xf]
                %223 = vst [vmem:[%s193 + $0x38] sm:$0xf] %v222
                %v224 = vld [vmem:[%s192 + $0xb4] sm:$0xf]
                %225 = vst [vmem:[%s193 + $0x3c] sm:$0xf] %v224
              $region49: #{gcn_forward.2} parent=43 // loop_footer
                %s191 = sadd.s32 1, %s187
              $region50: #{gcn_forward.2} parent=43 // loop_footer_branch
                %186 = sbr.rel target = $region46
              $region51: #{gcn_forward.2} parent=43 // loop_exit
                _
            $region44: #{gcn_forward.2} parent=35 // pred_fallthru
              _
          $region36: #{gcn_forward.2} parent=31 // pred_fallthru
            _
          %277 = vnop
        $region32: #{gcn_forward.2} parent=27 // pred_fallthru
          _
      $region28: #{gcn_forward.2} parent=5 // pred_fallthru
        _
      %p278 = scmp.le.s32.totalorder 1, %s10
      %p279 = scmp.lt.s32.totalorder %s10, 10
      %p280 = pnand %p278, %p279
      %p281 = pneg %p280
      // Predicated region
      $region70: #{gcn_forward.2} parent=5 // pred_check
        _
      $region71: #{gcn_forward.2} parent=5 // pred_check_branch
        %283 = sbr.rel (%p280) target = $region73
      $region72: #{gcn_forward.2} parent=5 // pred_region
        %s284 = ssub.s32 %s10, 1
        %s285 = sand.u32 %s37, 1
        %s286 = sand.u32 %s37, 1
        %s287 = smul.addr %s286, 64
        %s288 = scalar_lea.vmem [#allocation3], %s287
        // Predicated region
        $region74: #{gcn_forward.2} parent=72 // pred_check
          %p289 = pneg %p50
        $region75: #{gcn_forward.2} parent=72 // pred_check_branch
          %291 = sbr.rel (%p289) target = $region77
        $region76: #{gcn_forward.2} parent=72 // pred_region
          _
        $region77: #{gcn_forward.2} parent=72 // pred_fallthru
          _
        %s292 = sand.u32 %s37, 1
        %s293 = sand.u32 %s37, 1
        %s294 = smul.addr %s293, 64
        %s295 = scalar_lea.vmem [#allocation3], %s294
        %p296 = pneg %p50
        %p297 = pneg %p47
        %p298 = pneg %p71
        %p299 = pneg %p68
        %p300 = pneg %p92
        %p301 = pneg %p89
        %p302 = pneg %p113
        %p303 = pneg %p110
        %p304 = pneg %p139
        %p305 = pneg %p136
        %s306 = smul.u32 16, %s19
        %p307 = scmp.lt.s32.totalorder %s306, 47
        %s308 = scalar_select %p307, %s306, 47
        %s309 = smul.addr %s308, 4
        %s310 = scalar_lea.vmem %s4, %s309
        %s311 = smul.u32 16, %s19
        %s312 = smul.u32 16, %s19
        %p313 = scmp.lt.s32.totalorder %s312, 47
        %s314 = scalar_select %p313, %s312, 47
        %s315 = smul.addr %s314, 4
        %s316 = scalar_lea.vmem %s4, %s315
        %s317 = smul.u32 16, %s19
        %p319 = scmp.eq.s32.totalorder %s20, 0
        // Predicated region
        $region78: #{gcn_forward.2} parent=72 // pred_check
          %p320 = pneg %p319
        $region79: #{gcn_forward.2} parent=72 // pred_check_branch
          %322 = sbr.rel (%p320) target = $region81
        $region80: #{gcn_forward.2} parent=72 // pred_region
          %323 = vst [vmem:[#allocation2] sm:$0xff] 0.0
          %324 = vst [vmem:[#allocation2 + $0x8] sm:$0xff] 0.0
          %325 = vst [vmem:[#allocation2 + $0x10] sm:$0xff] 0.0
          %326 = vst [vmem:[#allocation2 + $0x18] sm:$0xff] 0.0
          %327 = vst [vmem:[#allocation2 + $0x20] sm:$0xff] 0.0
          %328 = vst [vmem:[#allocation2 + $0x28] sm:$0xff] 0.0
          %329 = vst [vmem:[#allocation2 + $0x30] sm:$0xff] 0.0
          %330 = vst [vmem:[#allocation2 + $0x38] sm:$0xff] 0.0
          %331 = vst [vmem:[#allocation2 + $0x40] sm:$0xff] 0.0
          %332 = vst [vmem:[#allocation2 + $0x48] sm:$0xff] 0.0
          %333 = vst [vmem:[#allocation2 + $0x50] sm:$0xff] 0.0
          %334 = vst [vmem:[#allocation2 + $0x58] sm:$0xff] 0.0
          %335 = vst [vmem:[#allocation2 + $0x60] sm:$0xff] 0.0
          %336 = vst [vmem:[#allocation2 + $0x68] sm:$0xff] 0.0
          %337 = vst [vmem:[#allocation2 + $0x70] sm:$0xff] 0.0
          %338 = vst [vmem:[#allocation2 + $0x78] sm:$0xff] 0.0
        $region81: #{gcn_forward.2} parent=72 // pred_fallthru
          _
        %s339 = smul.u32 %s20, 128
        %v340 = vld [vmem:[#allocation2] sm:$0xff]
        %v341 = vld [vmem:[#allocation2 + $0x8] sm:$0xff]
        %v342 = vld [vmem:[#allocation2 + $0x10] sm:$0xff]
        %v343 = vld [vmem:[#allocation2 + $0x18] sm:$0xff]
        %v344 = vld [vmem:[#allocation2 + $0x20] sm:$0xff]
        %v345 = vld [vmem:[#allocation2 + $0x28] sm:$0xff]
        %v346 = vld [vmem:[#allocation2 + $0x30] sm:$0xff]
        %v347 = vld [vmem:[#allocation2 + $0x38] sm:$0xff]
        %v348 = vld [vmem:[#allocation2 + $0x40] sm:$0xff]
        %v349 = vld [vmem:[#allocation2 + $0x48] sm:$0xff]
        %v350 = vld [vmem:[#allocation2 + $0x50] sm:$0xff]
        %v351 = vld [vmem:[#allocation2 + $0x58] sm:$0xff]
        %v352 = vld [vmem:[#allocation2 + $0x60] sm:$0xff]
        %v353 = vld [vmem:[#allocation2 + $0x68] sm:$0xff]
        %v354 = vld [vmem:[#allocation2 + $0x70] sm:$0xff]
        %v355 = vld [vmem:[#allocation2 + $0x78] sm:$0xff]
        %v356 = vld [vmem:[%s288] sm:$0xf]
        %v357 = vld [vmem:[%s288 + $0x4] sm:$0xf]
        %v358 = vld [vmem:[%s288 + $0x8] sm:$0xf]
        %v359 = vld [vmem:[%s288 + $0xc] sm:$0xf]
        %v360 = vld [vmem:[%s288 + $0x10] sm:$0xf]
        %v361 = vld [vmem:[%s288 + $0x14] sm:$0xf]
        %v362 = vld [vmem:[%s288 + $0x18] sm:$0xf]
        %v363 = vld [vmem:[%s288 + $0x1c] sm:$0xf]
        %v364 = vld [vmem:[%s288 + $0x20] sm:$0xf]
        %v365 = vld [vmem:[%s288 + $0x24] sm:$0xf]
        %v366 = vld [vmem:[%s288 + $0x28] sm:$0xf]
        %v367 = vld [vmem:[%s288 + $0x2c] sm:$0xf]
        %v368 = vld [vmem:[%s288 + $0x30] sm:$0xf]
        %v369 = vld [vmem:[%s288 + $0x34] sm:$0xf]
        %v370 = vld [vmem:[%s288 + $0x38] sm:$0xf]
        %v371 = vld [vmem:[%s288 + $0x3c] sm:$0xf]
        %s372 = sshra.s32 %s339, 3
        %s373 = sand.u32 %s339, 7
        %s374 = smul.addr %s372, 4
        %s375 = scalar_lea.vmem %s1, %s374
        %v376 = vld [vmem:[%s375] sm:$0xf]
        %v377 = vld [vmem:[%s375 + $0x4] sm:$0xf]
        %v378 = vld [vmem:[%s375 + $0x8] sm:$0xf]
        %v379 = vld [vmem:[%s375 + $0xc] sm:$0xf]
        %v380 = vld [vmem:[%s375 + $0x10] sm:$0xf]
        %v381 = vld [vmem:[%s375 + $0x14] sm:$0xf]
        %v382 = vld [vmem:[%s375 + $0x18] sm:$0xf]
        %v383 = vld [vmem:[%s375 + $0x1c] sm:$0xf]
        %v384 = vld [vmem:[%s375 + $0x20] sm:$0xf]
        %v385 = vld [vmem:[%s375 + $0x24] sm:$0xf]
        %v386 = vld [vmem:[%s375 + $0x28] sm:$0xf]
        %v387 = vld [vmem:[%s375 + $0x2c] sm:$0xf]
        %v388 = vld [vmem:[%s375 + $0x30] sm:$0xf]
        %v389 = vld [vmem:[%s375 + $0x34] sm:$0xf]
        %v390 = vld [vmem:[%s375 + $0x38] sm:$0xf]
        %v391 = vld [vmem:[%s375 + $0x3c] sm:$0xf]
        %v408 = vunpack.c.l.b16 %v356
        %v409 = vunpack.c.l.b16 %v357
        %v410 = vunpack.c.l.b16 %v358
        %v411 = vunpack.c.l.b16 %v359
        %v412 = vunpack.c.l.b16 %v360
        %v413 = vunpack.c.l.b16 %v361
        %v414 = vunpack.c.l.b16 %v362
        %v415 = vunpack.c.l.b16 %v363
        %v416 = vunpack.c.l.b16 %v364
        %v417 = vunpack.c.l.b16 %v365
        %v418 = vunpack.c.l.b16 %v366
        %v419 = vunpack.c.l.b16 %v367
        %v420 = vunpack.c.l.b16 %v368
        %v421 = vunpack.c.l.b16 %v369
        %v422 = vunpack.c.l.b16 %v370
        %v423 = vunpack.c.l.b16 %v371
        %v424 = vpack.c.b16 %v409, %v408
        %v425 = vpack.c.b16 %v411, %v410
        %v426 = vpack.c.b16 %v413, %v412
        %v427 = vpack.c.b16 %v415, %v414
        %v428 = vpack.c.b16 %v417, %v416
        %v429 = vpack.c.b16 %v419, %v418
        %v430 = vpack.c.b16 %v421, %v420
        %v431 = vpack.c.b16 %v423, %v422
        %v456 = vunpack.c.l.b16 %v376
        %v457 = vunpack.c.l.b16 %v377
        %v458 = vunpack.c.l.b16 %v378
        %v459 = vunpack.c.l.b16 %v379
        %v460 = vunpack.c.l.b16 %v380
        %v461 = vunpack.c.l.b16 %v381
        %v462 = vunpack.c.l.b16 %v382
        %v463 = vunpack.c.l.b16 %v383
        %v464 = vunpack.c.l.b16 %v384
        %v465 = vunpack.c.l.b16 %v385
        %v466 = vunpack.c.l.b16 %v386
        %v467 = vunpack.c.l.b16 %v387
        %v468 = vunpack.c.l.b16 %v388
        %v469 = vunpack.c.l.b16 %v389
        %v470 = vunpack.c.l.b16 %v390
        %v471 = vunpack.c.l.b16 %v391
        %v472 = vpack.c.b16 %v457, %v456
        %v473 = vpack.c.b16 %v459, %v458
        %v474 = vpack.c.b16 %v461, %v460
        %v475 = vpack.c.b16 %v463, %v462
        %v476 = vpack.c.b16 %v465, %v464
        %v477 = vpack.c.b16 %v467, %v466
        %v478 = vpack.c.b16 %v469, %v468
        %v479 = vpack.c.b16 %v471, %v470
        %488 = vmatprep.subr.bf16.mxu0 0
        %489 = vmatpush1.bf16.msra.mxu0 %v472
        %490 = vmatprep.subr.bf16.mxu0 0
        %491 = vmatpush1.bf16.msra.mxu0 %v473
        %492 = vmatprep.subr.bf16.mxu0 0
        %493 = vmatpush1.bf16.msra.mxu0 %v474
        %494 = vmatprep.subr.bf16.mxu0 0
        %495 = vmatpush1.bf16.msra.mxu0 %v475
        %496 = vmatprep.subr.bf16.mxu0 0
        %497 = vmatpush1.bf16.msra.mxu0 %v476
        %498 = vmatprep.subr.bf16.mxu0 0
        %499 = vmatpush1.bf16.msra.mxu0 %v477
        %500 = vmatprep.subr.bf16.mxu0 0
        %501 = vmatpush1.bf16.msra.mxu0 %v478
        %502 = vmatprep.subr.bf16.mxu0 0
        %503 = vmatpush1.bf16.msra.mxu0 %v479
        %504 = vmatprep.subr.bf16.mxu0 0
        %505 = vmatpush1.bf16.msra.mxu0 0
        %506 = vmatprep.subr.bf16.mxu0 0
        %507 = vmatpush1.bf16.msra.mxu0 0
        %508 = vmatprep.subr.bf16.mxu0 0
        %509 = vmatpush1.bf16.msra.mxu0 0
        %510 = vmatprep.subr.bf16.mxu0 0
        %511 = vmatpush1.bf16.msra.mxu0 0
        %512 = vmatprep.subr.bf16.mxu0 0
        %513 = vmatpush1.bf16.msra.mxu0 0
        %514 = vmatprep.subr.bf16.mxu0 0
        %515 = vmatpush1.bf16.msra.mxu0 0
        %516 = vmatprep.subr.bf16.mxu0 0
        %517 = vmatpush1.bf16.msra.mxu0 0
        %518 = vmatprep.subr.bf16.mxu0 0
        %519 = vmatpush1.bf16.msra.mxu0 0
        %520 = vmatprep.mubr.bf16.mxu0 0
        %521 = vmatmul.mubr.bf16.gmra.mrb[0].mxu0 %v424
        %v522 = vpop.f32.mrb[0].mxu0
        %v523 = vadd.f32 0.0, %v522
        %v524 = vpop.f32.mrb[0].mxu0
        %v525 = vpop.f32.mrb[0].mxu0
        %v526 = vadd.f32 0.0, %v525
        %v527 = vpop.f32.mrb[0].mxu0
        %528 = vmatprep.mubr.bf16.mxu0 0
        %529 = vmatmul.mubr.bf16.gmra.mrb[0].mxu0 %v425
        %v530 = vpop.f32.mrb[0].mxu0
        %v531 = vadd.f32 0.0, %v530
        %v532 = vpop.f32.mrb[0].mxu0
        %v533 = vpop.f32.mrb[0].mxu0
        %v534 = vadd.f32 0.0, %v533
        %v535 = vpop.f32.mrb[0].mxu0
        %536 = vmatprep.mubr.bf16.mxu0 0
        %537 = vmatmul.mubr.bf16.gmra.mrb[0].mxu0 %v426
        %v538 = vpop.f32.mrb[0].mxu0
        %v539 = vadd.f32 0.0, %v538
        %v540 = vpop.f32.mrb[0].mxu0
        %v541 = vpop.f32.mrb[0].mxu0
        %v542 = vadd.f32 0.0, %v541
        %v543 = vpop.f32.mrb[0].mxu0
        %544 = vmatprep.mubr.bf16.mxu0 0
        %545 = vmatmul.mubr.bf16.gmra.mrb[0].mxu0 %v427
        %v546 = vpop.f32.mrb[0].mxu0
        %v547 = vadd.f32 0.0, %v546
        %v548 = vpop.f32.mrb[0].mxu0
        %v549 = vpop.f32.mrb[0].mxu0
        %v550 = vadd.f32 0.0, %v549
        %v551 = vpop.f32.mrb[0].mxu0
        %552 = vmatprep.mubr.bf16.mxu0 0
        %553 = vmatmul.mubr.bf16.gmra.mrb[0].mxu0 %v428
        %v554 = vpop.f32.mrb[0].mxu0
        %v555 = vadd.f32 0.0, %v554
        %v556 = vpop.f32.mrb[0].mxu0
        %v557 = vpop.f32.mrb[0].mxu0
        %v558 = vadd.f32 0.0, %v557
        %v559 = vpop.f32.mrb[0].mxu0
        %560 = vmatprep.mubr.bf16.mxu0 0
        %561 = vmatmul.mubr.bf16.gmra.mrb[0].mxu0 %v429
        %v562 = vpop.f32.mrb[0].mxu0
        %v563 = vadd.f32 0.0, %v562
        %v564 = vpop.f32.mrb[0].mxu0
        %v565 = vpop.f32.mrb[0].mxu0
        %v566 = vadd.f32 0.0, %v565
        %v567 = vpop.f32.mrb[0].mxu0
        %568 = vmatprep.mubr.bf16.mxu0 0
        %569 = vmatmul.mubr.bf16.gmra.mrb[0].mxu0 %v430
        %v570 = vpop.f32.mrb[0].mxu0
        %v571 = vadd.f32 0.0, %v570
        %v572 = vpop.f32.mrb[0].mxu0
        %v573 = vpop.f32.mrb[0].mxu0
        %v574 = vadd.f32 0.0, %v573
        %v575 = vpop.f32.mrb[0].mxu0
        %576 = vmatprep.mubr.bf16.mxu0 0
        %577 = vmatmul.mubr.bf16.gmra.mrb[0].mxu0 %v431
        %v578 = vpop.f32.mrb[0].mxu0
        %v579 = vadd.f32 0.0, %v578
        %v580 = vpop.f32.mrb[0].mxu0
        %v581 = vpop.f32.mrb[0].mxu0
        %v582 = vadd.f32 0.0, %v581
        %v583 = vpop.f32.mrb[0].mxu0
        %584 = vdwg.mxu0
        %v585 = vadd.f32 %v340, %v523
        %v586 = vadd.f32 %v341, %v526
        %v587 = vadd.f32 %v342, %v531
        %v588 = vadd.f32 %v343, %v534
        %v589 = vadd.f32 %v344, %v539
        %v590 = vadd.f32 %v345, %v542
        %v591 = vadd.f32 %v346, %v547
        %v592 = vadd.f32 %v347, %v550
        %v593 = vadd.f32 %v348, %v555
        %v594 = vadd.f32 %v349, %v558
        %v595 = vadd.f32 %v350, %v563
        %v596 = vadd.f32 %v351, %v566
        %v597 = vadd.f32 %v352, %v571
        %v598 = vadd.f32 %v353, %v574
        %v599 = vadd.f32 %v354, %v579
        %v600 = vadd.f32 %v355, %v582
        %601 = vst [vmem:[#allocation2] sm:$0xff] %v585
        %602 = vst [vmem:[#allocation2 + $0x8] sm:$0xff] %v586
        %603 = vst [vmem:[#allocation2 + $0x10] sm:$0xff] %v587
        %604 = vst [vmem:[#allocation2 + $0x18] sm:$0xff] %v588
        %605 = vst [vmem:[#allocation2 + $0x20] sm:$0xff] %v589
        %606 = vst [vmem:[#allocation2 + $0x28] sm:$0xff] %v590
        %607 = vst [vmem:[#allocation2 + $0x30] sm:$0xff] %v591
        %608 = vst [vmem:[#allocation2 + $0x38] sm:$0xff] %v592
        %609 = vst [vmem:[#allocation2 + $0x40] sm:$0xff] %v593
        %610 = vst [vmem:[#allocation2 + $0x48] sm:$0xff] %v594
        %611 = vst [vmem:[#allocation2 + $0x50] sm:$0xff] %v595
        %612 = vst [vmem:[#allocation2 + $0x58] sm:$0xff] %v596
        %613 = vst [vmem:[#allocation2 + $0x60] sm:$0xff] %v597
        %614 = vst [vmem:[#allocation2 + $0x68] sm:$0xff] %v598
        %615 = vst [vmem:[#allocation2 + $0x70] sm:$0xff] %v599
        %616 = vst [vmem:[#allocation2 + $0x78] sm:$0xff] %v600
        %p617 = scmp.eq.s32.totalorder %s20, 2
        // Predicated region
        $region82: #{gcn_forward.2} parent=72 // pred_check
          %p618 = pneg %p617
        $region83: #{gcn_forward.2} parent=72 // pred_check_branch
          %620 = sbr.rel (%p618) target = $region85
        $region84: #{gcn_forward.2} parent=72 // pred_region
          %v621 = vld [vmem:[#allocation2] sm:$0xff]
          %v622 = vld [vmem:[#allocation2 + $0x8] sm:$0xff]
          %v623 = vld [vmem:[#allocation2 + $0x10] sm:$0xff]
          %v624 = vld [vmem:[#allocation2 + $0x18] sm:$0xff]
          %v625 = vld [vmem:[#allocation2 + $0x20] sm:$0xff]
          %v626 = vld [vmem:[#allocation2 + $0x28] sm:$0xff]
          %v627 = vld [vmem:[#allocation2 + $0x30] sm:$0xff]
          %v628 = vld [vmem:[#allocation2 + $0x38] sm:$0xff]
          %v629 = vld [vmem:[#allocation2 + $0x40] sm:$0xff]
          %v630 = vld [vmem:[#allocation2 + $0x48] sm:$0xff]
          %v631 = vld [vmem:[#allocation2 + $0x50] sm:$0xff]
          %v632 = vld [vmem:[#allocation2 + $0x58] sm:$0xff]
          %v633 = vld [vmem:[#allocation2 + $0x60] sm:$0xff]
          %v634 = vld [vmem:[#allocation2 + $0x68] sm:$0xff]
          %v635 = vld [vmem:[#allocation2 + $0x70] sm:$0xff]
          %v636 = vld [vmem:[#allocation2 + $0x78] sm:$0xff]
          %v637 = vld [vmem:[%s2] sm:$0xff]
          %v638 = vld [vmem:[%s2 + $0x8] sm:$0xff]
          %v639 = vld [vmem:[%s2 + $0x10] sm:$0xff]
          %v640 = vld [vmem:[%s2 + $0x18] sm:$0xff]
          %v641 = vld [vmem:[%s2 + $0x20] sm:$0xff]
          %v642 = vld [vmem:[%s2 + $0x28] sm:$0xff]
          %v643 = vld [vmem:[%s2 + $0x30] sm:$0xff]
          %v644 = vld [vmem:[%s2 + $0x38] sm:$0xff]
          %v645 = vld [vmem:[%s2 + $0x40] sm:$0xff]
          %v646 = vld [vmem:[%s2 + $0x48] sm:$0xff]
          %v647 = vld [vmem:[%s2 + $0x50] sm:$0xff]
          %v648 = vld [vmem:[%s2 + $0x58] sm:$0xff]
          %v649 = vld [vmem:[%s2 + $0x60] sm:$0xff]
          %v650 = vld [vmem:[%s2 + $0x68] sm:$0xff]
          %v651 = vld [vmem:[%s2 + $0x70] sm:$0xff]
          %v652 = vld [vmem:[%s2 + $0x78] sm:$0xff]
          %653 = vmatprep.subr.mxu0 0.0
          %654 = vmatpush1.msra.mxu0 %v637
          %655 = vmatprep.subr.mxu0 0.0
          %656 = vmatpush1.msra.mxu0 %v638
          %657 = vmatprep.subr.mxu0 0.0
          %658 = vmatpush1.msra.mxu0 %v639
          %659 = vmatprep.subr.mxu0 0.0
          %660 = vmatpush1.msra.mxu0 %v640
          %661 = vmatprep.subr.mxu0 0.0
          %662 = vmatpush1.msra.mxu0 %v641
          %663 = vmatprep.subr.mxu0 0.0
          %664 = vmatpush1.msra.mxu0 %v642
          %665 = vmatprep.subr.mxu0 0.0
          %666 = vmatpush1.msra.mxu0 %v643
          %667 = vmatprep.subr.mxu0 0.0
          %668 = vmatpush1.msra.mxu0 %v644
          %669 = vmatprep.subr.mxu0 0.0
          %670 = vmatpush1.msra.mxu0 %v645
          %671 = vmatprep.subr.mxu0 0.0
          %672 = vmatpush1.msra.mxu0 %v646
          %673 = vmatprep.subr.mxu0 0.0
          %674 = vmatpush1.msra.mxu0 %v647
          %675 = vmatprep.subr.mxu0 0.0
          %676 = vmatpush1.msra.mxu0 %v648
          %677 = vmatprep.subr.mxu0 0.0
          %678 = vmatpush1.msra.mxu0 %v649
          %679 = vmatprep.subr.mxu0 0.0
          %680 = vmatpush1.msra.mxu0 %v650
          %681 = vmatprep.subr.mxu0 0.0
          %682 = vmatpush1.msra.mxu0 %v651
          %683 = vmatprep.subr.mxu0 0.0
          %684 = vmatpush1.msra.mxu0 %v652
          %685 = vmatprep.subr.mxu0 0.0
          %686 = vmatpush1.msra.mxu0 0.0
          %687 = vmatprep.subr.mxu0 0.0
          %688 = vmatpush1.msra.mxu0 0.0
          %689 = vmatprep.subr.mxu0 0.0
          %690 = vmatpush1.msra.mxu0 0.0
          %691 = vmatprep.subr.mxu0 0.0
          %692 = vmatpush1.msra.mxu0 0.0
          %693 = vmatprep.subr.mxu0 0.0
          %694 = vmatpush1.msra.mxu0 0.0
          %695 = vmatprep.subr.mxu0 0.0
          %696 = vmatpush1.msra.mxu0 0.0
          %697 = vmatprep.subr.mxu0 0.0
          %698 = vmatpush1.msra.mxu0 0.0
          %699 = vmatprep.subr.mxu0 0.0
          %700 = vmatpush1.msra.mxu0 0.0
          %701 = vmatprep.subr.mxu0 0.0
          %702 = vmatpush1.msra.mxu0 0.0
          %703 = vmatprep.subr.mxu0 0.0
          %704 = vmatpush1.msra.mxu0 0.0
          %705 = vmatprep.subr.mxu0 0.0
          %706 = vmatpush1.msra.mxu0 0.0
          %707 = vmatprep.subr.mxu0 0.0
          %708 = vmatpush1.msra.mxu0 0.0
          %709 = vmatprep.subr.mxu0 0.0
          %710 = vmatpush1.msra.mxu0 0.0
          %711 = vmatprep.subr.mxu0 0.0
          %712 = vmatpush1.msra.mxu0 0.0
          %713 = vmatprep.subr.mxu0 0.0
          %714 = vmatpush1.msra.mxu0 0.0
          %715 = vmatprep.subr.mxu0 0.0
          %716 = vmatpush1.msra.mxu0 0.0
          %717 = vmatprep.mubr.f32.mxu0 0.0
          %718 = vmatmul.mubr.f32.gmra.mrb[0].mxu0 %v621
          %v719 = vpop.f32.mrb[0].mxu0
          %v720 = vadd.f32 0.0, %v719
          %v721 = vpop.f32.mrb[0].mxu0
          %722 = vmatprep.mubr.f32.mxu0 0.0
          %723 = vmatmul.mubr.f32.gmra.mrb[0].mxu0 %v622
          %v724 = vpop.f32.mrb[0].mxu0
          %v725 = vadd.f32 0.0, %v724
          %v726 = vpop.f32.mrb[0].mxu0
          %727 = vmatprep.mubr.f32.mxu0 0.0
          %728 = vmatmul.mubr.f32.gmra.mrb[0].mxu0 %v623
          %v729 = vpop.f32.mrb[0].mxu0
          %v730 = vadd.f32 0.0, %v729
          %v731 = vpop.f32.mrb[0].mxu0
          %732 = vmatprep.mubr.f32.mxu0 0.0
          %733 = vmatmul.mubr.f32.gmra.mrb[0].mxu0 %v624
          %v734 = vpop.f32.mrb[0].mxu0
          %v735 = vadd.f32 0.0, %v734
          %v736 = vpop.f32.mrb[0].mxu0
          %737 = vmatprep.mubr.f32.mxu0 0.0
          %738 = vmatmul.mubr.f32.gmra.mrb[0].mxu0 %v625
          %v739 = vpop.f32.mrb[0].mxu0
          %v740 = vadd.f32 0.0, %v739
          %v741 = vpop.f32.mrb[0].mxu0
          %742 = vmatprep.mubr.f32.mxu0 0.0
          %743 = vmatmul.mubr.f32.gmra.mrb[0].mxu0 %v626
          %v744 = vpop.f32.mrb[0].mxu0
          %v745 = vadd.f32 0.0, %v744
          %v746 = vpop.f32.mrb[0].mxu0
          %747 = vmatprep.mubr.f32.mxu0 0.0
          %748 = vmatmul.mubr.f32.gmra.mrb[0].mxu0 %v627
          %v749 = vpop.f32.mrb[0].mxu0
          %v750 = vadd.f32 0.0, %v749
          %v751 = vpop.f32.mrb[0].mxu0
          %752 = vmatprep.mubr.f32.mxu0 0.0
          %753 = vmatmul.mubr.f32.gmra.mrb[0].mxu0 %v628
          %v754 = vpop.f32.mrb[0].mxu0
          %v755 = vadd.f32 0.0, %v754
          %v756 = vpop.f32.mrb[0].mxu0
          %757 = vmatprep.mubr.f32.mxu0 0.0
          %758 = vmatmul.mubr.f32.gmra.mrb[0].mxu0 %v629
          %v759 = vpop.f32.mrb[0].mxu0
          %v760 = vadd.f32 0.0, %v759
          %v761 = vpop.f32.mrb[0].mxu0
          %762 = vmatprep.mubr.f32.mxu0 0.0
          %763 = vmatmul.mubr.f32.gmra.mrb[0].mxu0 %v630
          %v764 = vpop.f32.mrb[0].mxu0
          %v765 = vadd.f32 0.0, %v764
          %v766 = vpop.f32.mrb[0].mxu0
          %767 = vmatprep.mubr.f32.mxu0 0.0
          %768 = vmatmul.mubr.f32.gmra.mrb[0].mxu0 %v631
          %v769 = vpop.f32.mrb[0].mxu0
          %v770 = vadd.f32 0.0, %v769
          %v771 = vpop.f32.mrb[0].mxu0
          %772 = vmatprep.mubr.f32.mxu0 0.0
          %773 = vmatmul.mubr.f32.gmra.mrb[0].mxu0 %v632
          %v774 = vpop.f32.mrb[0].mxu0
          %v775 = vadd.f32 0.0, %v774
          %v776 = vpop.f32.mrb[0].mxu0
          %777 = vmatprep.mubr.f32.mxu0 0.0
          %778 = vmatmul.mubr.f32.gmra.mrb[0].mxu0 %v633
          %v779 = vpop.f32.mrb[0].mxu0
          %v780 = vadd.f32 0.0, %v779
          %v781 = vpop.f32.mrb[0].mxu0
          %782 = vmatprep.mubr.f32.mxu0 0.0
          %783 = vmatmul.mubr.f32.gmra.mrb[0].mxu0 %v634
          %v784 = vpop.f32.mrb[0].mxu0
          %v785 = vadd.f32 0.0, %v784
          %v786 = vpop.f32.mrb[0].mxu0
          %787 = vmatprep.mubr.f32.mxu0 0.0
          %788 = vmatmul.mubr.f32.gmra.mrb[0].mxu0 %v635
          %v789 = vpop.f32.mrb[0].mxu0
          %v790 = vadd.f32 0.0, %v789
          %v791 = vpop.f32.mrb[0].mxu0
          %792 = vmatprep.mubr.f32.mxu0 0.0
          %793 = vmatmul.mubr.f32.gmra.mrb[0].mxu0 %v636
          %v794 = vpop.f32.mrb[0].mxu0
          %v795 = vadd.f32 0.0, %v794
          %v796 = vpop.f32.mrb[0].mxu0
          %797 = vdwg.mxu0
          %v798 = vmax.f32 %v720, 0.0
          %v799 = vmax.f32 %v725, 0.0
          %v800 = vmax.f32 %v730, 0.0
          %v801 = vmax.f32 %v735, 0.0
          %v802 = vmax.f32 %v740, 0.0
          %v803 = vmax.f32 %v745, 0.0
          %v804 = vmax.f32 %v750, 0.0
          %v805 = vmax.f32 %v755, 0.0
          %v806 = vmax.f32 %v760, 0.0
          %v807 = vmax.f32 %v765, 0.0
          %v808 = vmax.f32 %v770, 0.0
          %v809 = vmax.f32 %v775, 0.0
          %v810 = vmax.f32 %v780, 0.0
          %v811 = vmax.f32 %v785, 0.0
          %v812 = vmax.f32 %v790, 0.0
          %v813 = vmax.f32 %v795, 0.0
          %v814 = vld [vmem:[%s3] sm:$0xff]
          %v815 = vld [vmem:[%s3 + $0x8] sm:$0xff]
          %v816 = vld [vmem:[%s3 + $0x10] sm:$0xff]
          %v817 = vld [vmem:[%s3 + $0x18] sm:$0xff]
          %v818 = vld [vmem:[%s3 + $0x20] sm:$0xff]
          %v819 = vld [vmem:[%s3 + $0x28] sm:$0xff]
          %v820 = vld [vmem:[%s3 + $0x30] sm:$0xff]
          %v821 = vld [vmem:[%s3 + $0x38] sm:$0xff]
          %v822 = vld [vmem:[%s3 + $0x40] sm:$0xff]
          %v823 = vld [vmem:[%s3 + $0x48] sm:$0xff]
          %v824 = vld [vmem:[%s3 + $0x50] sm:$0xff]
          %v825 = vld [vmem:[%s3 + $0x58] sm:$0xff]
          %v826 = vld [vmem:[%s3 + $0x60] sm:$0xff]
          %v827 = vld [vmem:[%s3 + $0x68] sm:$0xff]
          %v828 = vld [vmem:[%s3 + $0x70] sm:$0xff]
          %v829 = vld [vmem:[%s3 + $0x78] sm:$0xff]
          %830 = vmatprep.subr.mxu0 0.0
          %831 = vmatpush1.msra.mxu0 %v814
          %832 = vmatprep.subr.mxu0 0.0
          %833 = vmatpush1.msra.mxu0 %v815
          %834 = vmatprep.subr.mxu0 0.0
          %835 = vmatpush1.msra.mxu0 %v816
          %836 = vmatprep.subr.mxu0 0.0
          %837 = vmatpush1.msra.mxu0 %v817
          %838 = vmatprep.subr.mxu0 0.0
          %839 = vmatpush1.msra.mxu0 %v818
          %840 = vmatprep.subr.mxu0 0.0
          %841 = vmatpush1.msra.mxu0 %v819
          %842 = vmatprep.subr.mxu0 0.0
          %843 = vmatpush1.msra.mxu0 %v820
          %844 = vmatprep.subr.mxu0 0.0
          %845 = vmatpush1.msra.mxu0 %v821
          %846 = vmatprep.subr.mxu0 0.0
          %847 = vmatpush1.msra.mxu0 %v822
          %848 = vmatprep.subr.mxu0 0.0
          %849 = vmatpush1.msra.mxu0 %v823
          %850 = vmatprep.subr.mxu0 0.0
          %851 = vmatpush1.msra.mxu0 %v824
          %852 = vmatprep.subr.mxu0 0.0
          %853 = vmatpush1.msra.mxu0 %v825
          %854 = vmatprep.subr.mxu0 0.0
          %855 = vmatpush1.msra.mxu0 %v826
          %856 = vmatprep.subr.mxu0 0.0
          %857 = vmatpush1.msra.mxu0 %v827
          %858 = vmatprep.subr.mxu0 0.0
          %859 = vmatpush1.msra.mxu0 %v828
          %860 = vmatprep.subr.mxu0 0.0
          %861 = vmatpush1.msra.mxu0 %v829
          %862 = vmatprep.subr.mxu0 0.0
          %863 = vmatpush1.msra.mxu0 0.0
          %864 = vmatprep.subr.mxu0 0.0
          %865 = vmatpush1.msra.mxu0 0.0
          %866 = vmatprep.subr.mxu0 0.0
          %867 = vmatpush1.msra.mxu0 0.0
          %868 = vmatprep.subr.mxu0 0.0
          %869 = vmatpush1.msra.mxu0 0.0
          %870 = vmatprep.subr.mxu0 0.0
          %871 = vmatpush1.msra.mxu0 0.0
          %872 = vmatprep.subr.mxu0 0.0
          %873 = vmatpush1.msra.mxu0 0.0
          %874 = vmatprep.subr.mxu0 0.0
          %875 = vmatpush1.msra.mxu0 0.0
          %876 = vmatprep.subr.mxu0 0.0
          %877 = vmatpush1.msra.mxu0 0.0
          %878 = vmatprep.subr.mxu0 0.0
          %879 = vmatpush1.msra.mxu0 0.0
          %880 = vmatprep.subr.mxu0 0.0
          %881 = vmatpush1.msra.mxu0 0.0
          %882 = vmatprep.subr.mxu0 0.0
          %883 = vmatpush1.msra.mxu0 0.0
          %884 = vmatprep.subr.mxu0 0.0
          %885 = vmatpush1.msra.mxu0 0.0
          %886 = vmatprep.subr.mxu0 0.0
          %887 = vmatpush1.msra.mxu0 0.0
          %888 = vmatprep.subr.mxu0 0.0
          %889 = vmatpush1.msra.mxu0 0.0
          %890 = vmatprep.subr.mxu0 0.0
          %891 = vmatpush1.msra.mxu0 0.0
          %892 = vmatprep.subr.mxu0 0.0
          %893 = vmatpush1.msra.mxu0 0.0
          %894 = vmatprep.mubr.f32.mxu0 0.0
          %895 = vmatmul.mubr.f32.gmra.mrb[0].mxu0 %v798
          %v896 = vpop.f32.mrb[0].mxu0
          %v897 = vadd.f32 0.0, %v896
          %v898 = vpop.f32.mrb[0].mxu0
          %899 = vmatprep.mubr.f32.mxu0 0.0
          %900 = vmatmul.mubr.f32.gmra.mrb[0].mxu0 %v799
          %v901 = vpop.f32.mrb[0].mxu0
          %v902 = vadd.f32 0.0, %v901
          %v903 = vpop.f32.mrb[0].mxu0
          %904 = vmatprep.mubr.f32.mxu0 0.0
          %905 = vmatmul.mubr.f32.gmra.mrb[0].mxu0 %v800
          %v906 = vpop.f32.mrb[0].mxu0
          %v907 = vadd.f32 0.0, %v906
          %v908 = vpop.f32.mrb[0].mxu0
          %909 = vmatprep.mubr.f32.mxu0 0.0
          %910 = vmatmul.mubr.f32.gmra.mrb[0].mxu0 %v801
          %v911 = vpop.f32.mrb[0].mxu0
          %v912 = vadd.f32 0.0, %v911
          %v913 = vpop.f32.mrb[0].mxu0
          %914 = vmatprep.mubr.f32.mxu0 0.0
          %915 = vmatmul.mubr.f32.gmra.mrb[0].mxu0 %v802
          %v916 = vpop.f32.mrb[0].mxu0
          %v917 = vadd.f32 0.0, %v916
          %v918 = vpop.f32.mrb[0].mxu0
          %919 = vmatprep.mubr.f32.mxu0 0.0
          %920 = vmatmul.mubr.f32.gmra.mrb[0].mxu0 %v803
          %v921 = vpop.f32.mrb[0].mxu0
          %v922 = vadd.f32 0.0, %v921
          %v923 = vpop.f32.mrb[0].mxu0
          %924 = vmatprep.mubr.f32.mxu0 0.0
          %925 = vmatmul.mubr.f32.gmra.mrb[0].mxu0 %v804
          %v926 = vpop.f32.mrb[0].mxu0
          %v927 = vadd.f32 0.0, %v926
          %v928 = vpop.f32.mrb[0].mxu0
          %929 = vmatprep.mubr.f32.mxu0 0.0
          %930 = vmatmul.mubr.f32.gmra.mrb[0].mxu0 %v805
          %v931 = vpop.f32.mrb[0].mxu0
          %v932 = vadd.f32 0.0, %v931
          %v933 = vpop.f32.mrb[0].mxu0
          %934 = vmatprep.mubr.f32.mxu0 0.0
          %935 = vmatmul.mubr.f32.gmra.mrb[0].mxu0 %v806
          %v936 = vpop.f32.mrb[0].mxu0
          %v937 = vadd.f32 0.0, %v936
          %v938 = vpop.f32.mrb[0].mxu0
          %939 = vmatprep.mubr.f32.mxu0 0.0
          %940 = vmatmul.mubr.f32.gmra.mrb[0].mxu0 %v807
          %v941 = vpop.f32.mrb[0].mxu0
          %v942 = vadd.f32 0.0, %v941
          %v943 = vpop.f32.mrb[0].mxu0
          %944 = vmatprep.mubr.f32.mxu0 0.0
          %945 = vmatmul.mubr.f32.gmra.mrb[0].mxu0 %v808
          %v946 = vpop.f32.mrb[0].mxu0
          %v947 = vadd.f32 0.0, %v946
          %v948 = vpop.f32.mrb[0].mxu0
          %949 = vmatprep.mubr.f32.mxu0 0.0
          %950 = vmatmul.mubr.f32.gmra.mrb[0].mxu0 %v809
          %v951 = vpop.f32.mrb[0].mxu0
          %v952 = vadd.f32 0.0, %v951
          %v953 = vpop.f32.mrb[0].mxu0
          %954 = vmatprep.mubr.f32.mxu0 0.0
          %955 = vmatmul.mubr.f32.gmra.mrb[0].mxu0 %v810
          %v956 = vpop.f32.mrb[0].mxu0
          %v957 = vadd.f32 0.0, %v956
          %v958 = vpop.f32.mrb[0].mxu0
          %959 = vmatprep.mubr.f32.mxu0 0.0
          %960 = vmatmul.mubr.f32.gmra.mrb[0].mxu0 %v811
          %v961 = vpop.f32.mrb[0].mxu0
          %v962 = vadd.f32 0.0, %v961
          %v963 = vpop.f32.mrb[0].mxu0
          %964 = vmatprep.mubr.f32.mxu0 0.0
          %965 = vmatmul.mubr.f32.gmra.mrb[0].mxu0 %v812
          %v966 = vpop.f32.mrb[0].mxu0
          %v967 = vadd.f32 0.0, %v966
          %v968 = vpop.f32.mrb[0].mxu0
          %969 = vmatprep.mubr.f32.mxu0 0.0
          %970 = vmatmul.mubr.f32.gmra.mrb[0].mxu0 %v813
          %v971 = vpop.f32.mrb[0].mxu0
          %v972 = vadd.f32 0.0, %v971
          %v973 = vpop.f32.mrb[0].mxu0
          %974 = vdwg.mxu0
          %v975 = vpack.c.bf16 %v902, %v897
          %v976 = vpack.c.bf16 %v912, %v907
          %v977 = vpack.c.bf16 %v922, %v917
          %v978 = vpack.c.bf16 %v932, %v927
          %v979 = vpack.c.bf16 %v942, %v937
          %v980 = vpack.c.bf16 %v952, %v947
          %v981 = vpack.c.bf16 %v962, %v957
          %v982 = vpack.c.bf16 %v972, %v967
          %v991 = vunpack.c.l.b16 %v975
          %v992 = vunpack.c.h.b16 %v975
          %v993 = vunpack.c.l.b16 %v976
          %v994 = vunpack.c.h.b16 %v976
          %v995 = vunpack.c.l.b16 %v977
          %v996 = vunpack.c.h.b16 %v977
          %v997 = vunpack.c.l.b16 %v978
          %v998 = vunpack.c.h.b16 %v978
          %v999 = vunpack.c.l.b16 %v979
          %v1000 = vunpack.c.h.b16 %v979
          %v1001 = vunpack.c.l.b16 %v980
          %v1002 = vunpack.c.h.b16 %v980
          %v1003 = vunpack.c.l.b16 %v981
          %v1004 = vunpack.c.h.b16 %v981
          %v1005 = vunpack.c.l.b16 %v982
          %v1006 = vunpack.c.h.b16 %v982
          %v1007 = vpack.c.b16 %v991, %v991
          %v1008 = vpack.c.b16 %v992, %v992
          %v1009 = vpack.c.b16 %v993, %v993
          %v1010 = vpack.c.b16 %v994, %v994
          %v1011 = vpack.c.b16 %v995, %v995
          %v1012 = vpack.c.b16 %v996, %v996
          %v1013 = vpack.c.b16 %v997, %v997
          %v1014 = vpack.c.b16 %v998, %v998
          %v1015 = vpack.c.b16 %v999, %v999
          %v1016 = vpack.c.b16 %v1000, %v1000
          %v1017 = vpack.c.b16 %v1001, %v1001
          %v1018 = vpack.c.b16 %v1002, %v1002
          %v1019 = vpack.c.b16 %v1003, %v1003
          %v1020 = vpack.c.b16 %v1004, %v1004
          %v1021 = vpack.c.b16 %v1005, %v1005
          %v1022 = vpack.c.b16 %v1006, %v1006
          %1039 = vst [vmem:[%s316] sm:$0xf] %v1007
          %1040 = vst [vmem:[%s316 + $0x4] sm:$0xf] %v1008
          %1041 = vst [vmem:[%s316 + $0x8] sm:$0xf] %v1009
          %1042 = vst [vmem:[%s316 + $0xc] sm:$0xf] %v1010
          %1043 = vst [vmem:[%s316 + $0x10] sm:$0xf] %v1011
          %1044 = vst [vmem:[%s316 + $0x14] sm:$0xf] %v1012
          %1045 = vst [vmem:[%s316 + $0x18] sm:$0xf] %v1013
          %1046 = vst [vmem:[%s316 + $0x1c] sm:$0xf] %v1014
          %1047 = vst [vmem:[%s316 + $0x20] sm:$0xf] %v1015
          %1048 = vst [vmem:[%s316 + $0x24] sm:$0xf] %v1016
          %1049 = vst [vmem:[%s316 + $0x28] sm:$0xf] %v1017
          %1050 = vst [vmem:[%s316 + $0x2c] sm:$0xf] %v1018
          %1051 = vst [vmem:[%s316 + $0x30] sm:$0xf] %v1019
          %1052 = vst [vmem:[%s316 + $0x34] sm:$0xf] %v1020
          %1053 = vst [vmem:[%s316 + $0x38] sm:$0xf] %v1021
          %1054 = vst [vmem:[%s316 + $0x3c] sm:$0xf] %v1022
        $region85: #{gcn_forward.2} parent=72 // pred_fallthru
          _
        %s1055 = smul.u32 16, %s19
        %p1056 = scmp.lt.s32.totalorder %s1055, 47
        %s1057 = scalar_select %p1056, %s1055, 47
        %s1058 = smul.addr %s1057, 4
        %s1059 = scalar_lea.vmem %s4, %s1058
        // Predicated region
        $region86: #{gcn_forward.2} parent=72 // pred_check
          %p1060 = pneg %p136
        $region87: #{gcn_forward.2} parent=72 // pred_check_branch
          %1062 = sbr.rel (%p1060) target = $region89
        $region88: #{gcn_forward.2} parent=72 // pred_region
          %s1063 = smul.u32 16, %s19
        $region89: #{gcn_forward.2} parent=72 // pred_fallthru
          _
      $region73: #{gcn_forward.2} parent=5 // pred_fallthru
        _
      %p1064 = scmp.le.s32.totalorder 2, %s10
      // Predicated region
      $region90: #{gcn_forward.2} parent=5 // pred_check
        %p1065 = pneg %p1064
      $region91: #{gcn_forward.2} parent=5 // pred_check_branch
        %1067 = sbr.rel (%p1065) target = $region93
      $region92: #{gcn_forward.2} parent=5 // pred_region
        %s1068 = ssub.s32 %s10, 2
        // Predicated region
        $region94: #{gcn_forward.2} parent=92 // pred_check
          %p1069 = pneg %p142
        $region95: #{gcn_forward.2} parent=92 // pred_check_branch
          %1071 = sbr.rel (%p1069) target = $region97
        $region96: #{gcn_forward.2} parent=92 // pred_region
          %s1072 = smul.u32 16, %s21
          %p1073 = scmp.lt.s32.totalorder %s1072, 47
          %s1074 = scalar_select %p1073, %s1072, 47
          %s1075 = smul.addr %s1074, 4
          %s1076 = scalar_lea.vmem %s4, %s1075
        $region97: #{gcn_forward.2} parent=92 // pred_fallthru
          _
      $region93: #{gcn_forward.2} parent=5 // pred_fallthru
        _
    $region6: #{gcn_forward.2} parent=1 // loop_footer
      %s14 = sadd.s32 1, %s10
    $region7: #{gcn_forward.2} parent=1 // loop_footer_branch
      %9 = sbr.rel target = $region3
    $region8: #{gcn_forward.2} parent=1 // loop_exit
      _

</llo_original>
